<compile_context>
chip_gen: v7x
topology: tpu7x:2x2x1
jax: 0.10.0
libtpu: 0.0.40
codegen_flags: <defaults>
</compile_context>

<pallas_src>
import functools
import math

import jax
import jax.numpy as jnp
from jax.experimental import pallas as pl
from jax.experimental.pallas import tpu as pltpu

GINE_EPS = 0.0          # GINEConv default (train_eps=False)
BN_EPS = 1e-5           # torch BatchNorm1d default


# ------------------------------ small helpers -------------------------------

def _round_up(v, m):
    return ((v + m - 1) // m) * m


def _pad_rows(r, tile=512):
    """Return (padded_rows, row_tile) so padded_rows % row_tile == 0 and the tile
    is sublane friendly (multiple of 8; 512 when tiling is needed)."""
    if r <= tile:
        rp = _round_up(max(r, 1), 8)
        return rp, rp
    return _round_up(r, tile), tile


def _pad_to(a, rows, fill=0):
    pad = rows - a.shape[0]
    if pad == 0:
        return a
    widths = ((0, pad),) + ((0, 0),) * (a.ndim - 1)
    return jnp.pad(a, widths, constant_values=fill)


# ----------------------------- Pallas kernels -------------------------------

def _head_kernel(*refs, n_layers):
    """Fused n-layer MLP (Linear + ReLU after every layer, matching the torch
    Sequential built by GenericNode/EdgeEncoder)."""
    x_ref = refs[0]
    o_ref = refs[-1]
    h = x_ref[...]
    for l in range(n_layers):
        w = refs[1 + 2 * l][...]          # bf16 [in, out]
        b = refs[2 + 2 * l][...]          # f32  [1, out]
        h = jnp.dot(h.astype(jnp.bfloat16), w,
                    preferred_element_type=jnp.float32) + b
        h = jnp.maximum(h, 0.0)
    o_ref[...] = h


def fused_mlp_head(x, layers, row_tile):
    """x:[R,F] through the fused head MLP; rows tiled on a 'parallel' grid axis."""
    R = x.shape[0]
    in_specs = [pl.BlockSpec((row_tile, x.shape[1]), lambda i: (i, 0))]
    args = [x]
    for (w, b) in layers:
        in_specs.append(pl.BlockSpec(w.shape, lambda i: (0, 0)))
        in_specs.append(pl.BlockSpec(b.shape, lambda i: (0, 0)))
        args += [w, b]
    out_dim = layers[-1][0].shape[1]
    return pl.pallas_call(
        functools.partial(_head_kernel, n_layers=len(layers)),
        out_shape=jax.ShapeDtypeStruct((R, out_dim), jnp.float32),
        grid=(R // row_tile,),
        in_specs=in_specs,
        out_specs=pl.BlockSpec((row_tile, out_dim), lambda i: (i, 0)),
        compiler_params=pltpu.CompilerParams(dimension_semantics=("parallel",)),
    )(*args)


def _gc_layer_kernel(x_ref, src_ref, dst_ref, ea_ref, ew_ref,
                     w1_ref, b1_ref, w2_ref, b2_ref, o_ref, acc_ref, xbf_ref,
                     *, eps, relu_out):
    """One fused GINE layer over an edge-tiled 'arbitrary' reduction axis.

    message  = relu(x[src] + edge_attr) * edge_weight           (VPU, in VMEM)
    aggr    += onehot(dst) @ message                            (MXU, f32 acc)
    out      = relu?( BNfold( relu(((1+eps)x + aggr) @ w1 + b1) @ w2 + b2 ) )
    """
    e = pl.program_id(0)
    n_pad = x_ref.shape[0]
    te = src_ref.shape[0]

    @pl.when(e == 0)
    def _():
        acc_ref[...] = (1.0 + eps) * x_ref[...]
        xbf_ref[...] = x_ref[...].astype(jnp.bfloat16)   # cast once, reuse per tile

    # --- gather x_j via in-VMEM one-hot matmul (no HBM one-hot, no HBM x_j) ---
    # TODO(synk): could use jnp.take on the VMEM-resident x instead of a one-hot
    # matmul once dynamic-gather lowering is guaranteed on all targets.
    src = src_ref[...]                                            # (te, 1) i32
    node_iota = jax.lax.broadcasted_iota(jnp.int32, (te, n_pad), 1)
    src_onehot = (node_iota == src).astype(jnp.bfloat16)
    x_j = jnp.dot(src_onehot, xbf_ref[...],
                  preferred_element_type=jnp.float32)             # (te, D) f32

    # --- message + scatter-add (padded edges have edge_weight == 0) ---
    m = jnp.maximum(x_j + ea_ref[...], 0.0) * ew_ref[...]         # (te, D) f32
    dst = dst_ref[...]                                            # (1, te) i32
    dst_iota = jax.lax.broadcasted_iota(jnp.int32, (n_pad, te), 0)
    dst_onehot = (dst_iota == dst).astype(jnp.bfloat16)
    acc_ref[...] += jnp.dot(dst_onehot, m.astype(jnp.bfloat16),
                            preferred_element_type=jnp.float32)

    # --- epilogue: GIN MLP + folded BatchNorm (+ relu except last layer) ---
    @pl.when(e == pl.num_programs(0) - 1)
    def _():
        h = acc_ref[...]
        h1 = jnp.dot(h.astype(jnp.bfloat16), w1_ref[...],
                     preferred_element_type=jnp.float32) + b1_ref[...]
        h1 = jnp.maximum(h1, 0.0)
        h2 = jnp.dot(h1.astype(jnp.bfloat16), w2_ref[...],
                     preferred_element_type=jnp.float32) + b2_ref[...]
        if relu_out:
            h2 = jnp.maximum(h2, 0.0)
        o_ref[...] = h2


def fused_gine_layer(x, src, dst, edge_attr, edge_weight, w1, b1, w2f, b2f,
                     *, eps, relu_out, edge_tile):
    n_pad, d = x.shape
    e_pad = edge_attr.shape[0]
    return pl.pallas_call(
        functools.partial(_gc_layer_kernel, eps=float(eps), relu_out=relu_out),
        out_shape=jax.ShapeDtypeStruct((n_pad, d), jnp.float32),
        grid=(e_pad // edge_tile,),
        in_specs=[
            pl.BlockSpec((n_pad, d), lambda e: (0, 0)),          # x (resident)
            pl.BlockSpec((edge_tile, 1), lambda e: (e, 0)),      # src indices
            pl.BlockSpec((1, edge_tile), lambda e: (0, e)),      # dst indices
            pl.BlockSpec((edge_tile, d), lambda e: (e, 0)),      # edge_attr
            pl.BlockSpec((edge_tile, 1), lambda e: (e, 0)),      # edge_weight
            pl.BlockSpec(w1.shape, lambda e: (0, 0)),
            pl.BlockSpec(b1.shape, lambda e: (0, 0)),
            pl.BlockSpec(w2f.shape, lambda e: (0, 0)),
            pl.BlockSpec(b2f.shape, lambda e: (0, 0)),
        ],
        out_specs=pl.BlockSpec((n_pad, d), lambda e: (0, 0)),
        scratch_shapes=[pltpu.VMEM((n_pad, d), jnp.float32),     # f32 accumulator
                        pltpu.VMEM((n_pad, d), jnp.bfloat16)],   # cached bf16 x
        compiler_params=pltpu.CompilerParams(dimension_semantics=("arbitrary",)),
    )(x, src, dst, edge_attr, edge_weight, w1, b1, w2f, b2f)


def _pool_out_kernel(x_ref, batch_ref, w1_ref, b1_ref, w2_ref, b2_ref, o_ref,
                     *, num_graphs):
    """global_add_pool (in-VMEM one-hot) + L2 normalize + output MLP, fused."""
    batch = batch_ref[...]                                        # (1, N_pad) i32
    n_pad = batch.shape[1]
    g_iota = jax.lax.broadcasted_iota(jnp.int32, (num_graphs, n_pad), 0)
    pool = (g_iota == batch).astype(jnp.bfloat16)
    z = jnp.dot(pool, x_ref[...].astype(jnp.bfloat16),
                preferred_element_type=jnp.float32)               # (G, D)
    # TODO(synk): torch source calls normalize_l2(z) without reassigning the
    # result; we assume an in-place row-wise L2 normalization.
    inv = jax.lax.rsqrt(jnp.sum(z * z, axis=-1, keepdims=True) + 1e-24)
    z = z * inv
    z = jnp.maximum(jnp.dot(z.astype(jnp.bfloat16), w1_ref[...],
                            preferred_element_type=jnp.float32) + b1_ref[...], 0.0)
    o_ref[...] = jnp.dot(z.astype(jnp.bfloat16), w2_ref[...],
                         preferred_element_type=jnp.float32) + b2_ref[...]


def pooled_projection(node_emb, batch_row, out_layers, *, num_graphs):
    (w1, b1), (w2, b2) = out_layers
    vmem = pl.BlockSpec(memory_space=pltpu.MemorySpace.VMEM)
    return pl.pallas_call(
        functools.partial(_pool_out_kernel, num_graphs=num_graphs),
        out_shape=jax.ShapeDtypeStruct((num_graphs, w2.shape[1]), jnp.float32),
        in_specs=[vmem] * 6,
        out_specs=pl.BlockSpec(memory_space=pltpu.MemorySpace.VMEM),
    )(node_emb, batch_row, w1, b1, w2, b2)


# ------------------------------- parameters ---------------------------------

def xavier_uniform(key, fan_in, fan_out):
    a = math.sqrt(6.0 / (fan_in + fan_out))
    # stored as [in, out] (transpose of torch's [out, in]); same distribution.
    return jax.random.uniform(key, (fan_in, fan_out), jnp.float32, -a, a)


def mlp_layer_sizes(emb_dim, feat_dim, n_layers):
    spread = [min(emb_dim, feat_dim) + abs(feat_dim - emb_dim) * i
              for i in range(n_layers - 1)]
    return [feat_dim] + spread + [emb_dim]


def make_params(key, *, node_feature_dim, edge_feature_dim, proj_hidden_dim,
                output_dim, input_head_layers, num_gc_layers):
    keys = iter(jax.random.split(key, 64))
    params = {}

    def make_mlp(feat_dim):
        sizes = mlp_layer_sizes(proj_hidden_dim, feat_dim, input_head_layers)
        return [(xavier_uniform(next(keys), sizes[i], sizes[i + 1]),
                 jnp.zeros((sizes[i + 1],), jnp.float32))
                for i in range(input_head_layers)]

    params["atom_encoder"] = make_mlp(node_feature_dim)   # GenericNodeEncoder
    params["bond_encoder"] = make_mlp(edge_feature_dim)   # GenericEdgeEncoder

    D = proj_hidden_dim
    params["convs"] = []
    params["bns"] = []
    for _ in range(num_gc_layers):
        params["convs"].append({
            "w1": xavier_uniform(next(keys), D, 2 * D),
            "b1": jnp.zeros((2 * D,), jnp.float32),
            "w2": xavier_uniform(next(keys), 2 * D, D),
            "b2": jnp.zeros((D,), jnp.float32),
        })
        params["bns"].append({
            "gamma": jnp.ones((D,), jnp.float32),
            "beta": jnp.zeros((D,), jnp.float32),
            "mean": jnp.zeros((D,), jnp.float32),
            "var": jnp.ones((D,), jnp.float32),
        })

    params["output_layer"] = [
        (xavier_uniform(next(keys), D, proj_hidden_dim),
         jnp.zeros((proj_hidden_dim,), jnp.float32)),
        (xavier_uniform(next(keys), proj_hidden_dim, output_dim),
         jnp.zeros((output_dim,), jnp.float32)),
    ]
    return params


def _fold_bn(conv, bn):
    scale = bn["gamma"] * jax.lax.rsqrt(bn["var"] + BN_EPS)
    w2f = conv["w2"] * scale[None, :]
    b2f = (conv["b2"] - bn["mean"]) * scale + bn["beta"]
    return w2f, b2f


# --------------------------------- forward ----------------------------------

@functools.partial(jax.jit, static_argnames=("features", "training", "num_graphs"))
def featured_transfer_forward(params, batch, x, edge_index, edge_attr,
                              edge_weight=None, *, features=False,
                              training=False, num_graphs):
    N = x.shape[0]
    E = edge_index.shape[1]

    # torch: if not self.features or training -> replace inputs with ones
    if (not features) or training:
        x = jnp.ones_like(x)
        edge_attr = jnp.ones_like(edge_attr)
    # .to(torch.int) then .float() inside the encoders
    x = x.astype(jnp.int32).astype(jnp.float32)
    edge_attr = edge_attr.astype(jnp.int32).astype(jnp.float32)

    if edge_weight is None:
        edge_weight = jnp.ones((E, 1), jnp.float32)
    else:
        edge_weight = edge_weight.reshape(E, 1).astype(jnp.float32)

    # --- row padding so every block divides (8/128-friendly, grid-divisible) ---
    N_pad, n_tile = _pad_rows(N)
    E_pad, e_tile = _pad_rows(E)
    x = _pad_to(x, N_pad)
    edge_attr = _pad_to(edge_attr, E_pad)
    edge_weight = _pad_to(edge_weight, E_pad)          # weight 0 -> padded edges are no-ops
    src = _pad_to(edge_index[0].reshape(E, 1).astype(jnp.int32), E_pad)
    dst = _pad_to(edge_index[1].reshape(E, 1).astype(jnp.int32), E_pad).reshape(1, E_pad)
    batch_row = _pad_to(batch.reshape(N, 1).astype(jnp.int32), N_pad,
                        fill=-1).reshape(1, N_pad)     # -1 -> excluded from pooling

    def _bf(w):
        return w.astype(jnp.bfloat16)

    def _row(b):
        return b.reshape(1, -1).astype(jnp.float32)

    # --- fused input heads (Linear+ReLU after every layer, as in torch loop) ---
    atom_layers = [(_bf(w), _row(b)) for (w, b) in params["atom_encoder"]]
    bond_layers = [(_bf(w), _row(b)) for (w, b) in params["bond_encoder"]]
    x = fused_mlp_head(x, atom_layers, n_tile)                  # [N_pad, D]
    edge_attr = fused_mlp_head(edge_attr, bond_layers, e_tile)  # [E_pad, D]

    # --- fused GC layers (message + scatter + MLP + folded eval-BN + relu) ---
    n_layers = len(params["convs"])
    for i, (conv, bn) in enumerate(zip(params["convs"], params["bns"])):
        w2f, b2f = _fold_bn(conv, bn)
        # F.dropout(..., training=False) is identity; relu only on non-last layers
        x = fused_gine_layer(
            x, src, dst, edge_attr, edge_weight,
            _bf(conv["w1"]), _row(conv["b1"]), _bf(w2f), _row(b2f),
            eps=GINE_EPS, relu_out=(i != n_layers - 1), edge_tile=e_tile)

    node_emb = x[:N]

    # --- fused global_add_pool + L2 normalize + output MLP ---
    out_layers = [(_bf(w), _row(b)) for (w, b) in params["output_layer"]]
    z = pooled_projection(x, batch_row, out_layers, num_graphs=num_graphs)
    return z, node_emb


# ------------------------ pure-JAX reference (same casts) --------------------

def reference_forward(params, batch, x, edge_index, edge_attr, edge_weight=None,
                      *, features=False, num_graphs=1):
    if not features:
        x = jnp.ones_like(x)
        edge_attr = jnp.ones_like(edge_attr)
    x = x.astype(jnp.int32).astype(jnp.float32)
    edge_attr = edge_attr.astype(jnp.int32).astype(jnp.float32)
    E = edge_index.shape[1]
    if edge_weight is None:
        edge_weight = jnp.ones((E, 1), jnp.float32)

    def mlp(h, layers):
        for (w, b) in layers:
            h = jnp.dot(h.astype(jnp.bfloat16), w.astype(jnp.bfloat16),
                        preferred_element_type=jnp.float32) + b
            h = jnp.maximum(h, 0.0)
        return h

    x = mlp(x, params["atom_encoder"])
    ea = mlp(edge_attr, params["bond_encoder"])
    src, dst = edge_index[0], edge_index[1]
    N = x.shape[0]
    n_layers = len(params["convs"])
    for i, (conv, bn) in enumerate(zip(params["convs"], params["bns"])):
        x_bf = x.astype(jnp.bfloat16).astype(jnp.float32)
        m = jnp.maximum(x_bf[src] + ea, 0.0) * edge_weight
        aggr = jax.ops.segment_sum(m.astype(jnp.bfloat16).astype(jnp.float32),
                                   dst, num_segments=N)
        h = (1.0 + GINE_EPS) * x + aggr
        h1 = jnp.maximum(
            jnp.dot(h.astype(jnp.bfloat16), conv["w1"].astype(jnp.bfloat16),
                    preferred_element_type=jnp.float32) + conv["b1"], 0.0)
        w2f, b2f = _fold_bn(conv, bn)
        h2 = jnp.dot(h1.astype(jnp.bfloat16), w2f.astype(jnp.bfloat16),
                     preferred_element_type=jnp.float32) + b2f
        if i != n_layers - 1:
            h2 = jnp.maximum(h2, 0.0)
        x = h2
    node_emb = x
    z = jax.ops.segment_sum(x.astype(jnp.bfloat16).astype(jnp.float32),
                            batch, num_segments=num_graphs)
    z = z * jax.lax.rsqrt(jnp.sum(z * z, axis=-1, keepdims=True) + 1e-24)
    (w1, b1), (w2, b2) = params["output_layer"]
    z = jnp.maximum(jnp.dot(z.astype(jnp.bfloat16), w1.astype(jnp.bfloat16),
                            preferred_element_type=jnp.float32) + b1, 0.0)
    z = jnp.dot(z.astype(jnp.bfloat16), w2.astype(jnp.bfloat16),
                preferred_element_type=jnp.float32) + b2
    return z, node_emb


# ----------------------------------- main ------------------------------------

if __name__ == "__main__":
    node_feature_dim = 16
    edge_feature_dim = 16
    proj_hidden_dim = 32
    output_dim = 32
    input_head_layers = 3
    num_gc_layers = 2
    N, E, G = 16, 24, 2

    key = jax.random.PRNGKey(0)
    kp, kx, ke, kei, kb = jax.random.split(key, 5)

    params = make_params(kp,
                         node_feature_dim=node_feature_dim,
                         edge_feature_dim=edge_feature_dim,
                         proj_hidden_dim=proj_hidden_dim,
                         output_dim=output_dim,
                         input_head_layers=input_head_layers,
                         num_gc_layers=num_gc_layers)

    x = jax.random.normal(kx, (N, node_feature_dim), jnp.float32)
    edge_attr = jax.random.normal(ke, (E, edge_feature_dim), jnp.float32)
    edge_index = jax.random.randint(kei, (2, E), 0, N, dtype=jnp.int32)
    batch = jnp.sort(jax.random.randint(kb, (N,), 0, G, dtype=jnp.int32))

    z, node_emb = featured_transfer_forward(params, batch, x, edge_index,
                                            edge_attr, num_graphs=G)
    jax.block_until_ready((z, node_emb))
    assert z.shape == (G, output_dim) and node_emb.shape == (N, proj_hidden_dim)

    z_ref, ne_ref = reference_forward(params, batch, x, edge_index, edge_attr,
                                      num_graphs=G)
    assert jnp.allclose(z, z_ref, atol=2e-2, rtol=2e-2), "z mismatch vs reference"
    assert jnp.allclose(node_emb, ne_ref, atol=2e-2, rtol=2e-2), \
        "node_emb mismatch vs reference"
    print("KERNEL_OK")
</pallas_src>

<mosaic_0001>
module attributes {stable_mosaic.version = 11 : i64} {
  func.func @_head_kernel(%arg0: i32, %arg1: memref<16x16xf32, #tpu.memory_space<vmem>>, %arg2: memref<16x16xbf16, #tpu.memory_space<vmem>>, %arg3: memref<1x16xf32, #tpu.memory_space<vmem>>, %arg4: memref<16x32xbf16, #tpu.memory_space<vmem>>, %arg5: memref<1x32xf32, #tpu.memory_space<vmem>>, %arg6: memref<32x32xbf16, #tpu.memory_space<vmem>>, %arg7: memref<1x32xf32, #tpu.memory_space<vmem>>, %arg8: memref<16x32xf32, #tpu.memory_space<vmem>>) attributes {dimension_semantics = [#tpu.dimension_semantics<parallel>], iteration_bounds = array<i64: 1>, scalar_prefetch = 0 : i64, scratch_operands = 0 : i64, tpu.core_type = #tpu.core_type<tc>, window_params = [{transform_indices = @transform_0, window_bounds = array<i64: 16, 16>}, {pipeline_mode = #tpu.pipeline_mode<synchronous>, transform_indices = @transform_1, window_bounds = array<i64: 16, 16>}, {pipeline_mode = #tpu.pipeline_mode<synchronous>, transform_indices = @transform_2, window_bounds = array<i64: 1, 16>}, {pipeline_mode = #tpu.pipeline_mode<synchronous>, transform_indices = @transform_3, window_bounds = array<i64: 16, 32>}, {pipeline_mode = #tpu.pipeline_mode<synchronous>, transform_indices = @transform_4, window_bounds = array<i64: 1, 32>}, {pipeline_mode = #tpu.pipeline_mode<synchronous>, transform_indices = @transform_5, window_bounds = array<i64: 32, 32>}, {pipeline_mode = #tpu.pipeline_mode<synchronous>, transform_indices = @transform_6, window_bounds = array<i64: 1, 32>}, {transform_indices = @transform_7, window_bounds = array<i64: 16, 32>}]} {
    %c0 = arith.constant 0 : index
    %c0_0 = arith.constant 0 : index
    %0 = vector.load %arg1[%c0, %c0_0] : memref<16x16xf32, #tpu.memory_space<vmem>>, vector<16x16xf32>
    %c0_1 = arith.constant 0 : index
    %c0_2 = arith.constant 0 : index
    %1 = vector.load %arg2[%c0_1, %c0_2] : memref<16x16xbf16, #tpu.memory_space<vmem>>, vector<16x16xbf16>
    %c0_3 = arith.constant 0 : index
    %c0_4 = arith.constant 0 : index
    %2 = vector.load %arg3[%c0_3, %c0_4] : memref<1x16xf32, #tpu.memory_space<vmem>>, vector<1x16xf32>
    %3 = arith.truncf %0 : vector<16x16xf32> to vector<16x16xbf16>
    %cst = arith.constant dense<0.000000e+00> : vector<16x16xf32>
    %4 = tpu.matmul %3, %1, %cst {dimension_numbers = #tpu.dot_dimension_numbers<[1], [0], [0], [1], [0, 0, 1, 1], [], []>} : vector<16x16xbf16>, vector<16x16xbf16>, vector<16x16xf32> -> vector<16x16xf32>
    %5 = vector.broadcast %2 : vector<1x16xf32> to vector<16x16xf32>
    %6 = arith.addf %4, %5 : vector<16x16xf32>
    %cst_5 = arith.constant 0.000000e+00 : f32
    %7 = vector.broadcast %cst_5 : f32 to vector<16x16xf32>
    %8 = arith.maximumf %6, %7 : vector<16x16xf32>
    %c0_6 = arith.constant 0 : index
    %c0_7 = arith.constant 0 : index
    %9 = vector.load %arg4[%c0_6, %c0_7] : memref<16x32xbf16, #tpu.memory_space<vmem>>, vector<16x32xbf16>
    %c0_8 = arith.constant 0 : index
    %c0_9 = arith.constant 0 : index
    %10 = vector.load %arg5[%c0_8, %c0_9] : memref<1x32xf32, #tpu.memory_space<vmem>>, vector<1x32xf32>
    %11 = arith.truncf %8 : vector<16x16xf32> to vector<16x16xbf16>
    %cst_10 = arith.constant dense<0.000000e+00> : vector<16x32xf32>
    %12 = tpu.matmul %11, %9, %cst_10 {dimension_numbers = #tpu.dot_dimension_numbers<[1], [0], [0], [1], [0, 0, 1, 1], [], []>} : vector<16x16xbf16>, vector<16x32xbf16>, vector<16x32xf32> -> vector<16x32xf32>
    %13 = vector.broadcast %10 : vector<1x32xf32> to vector<16x32xf32>
    %14 = arith.addf %12, %13 : vector<16x32xf32>
    %cst_11 = arith.constant 0.000000e+00 : f32
    %15 = vector.broadcast %cst_11 : f32 to vector<16x32xf32>
    %16 = arith.maximumf %14, %15 : vector<16x32xf32>
    %c0_12 = arith.constant 0 : index
    %c0_13 = arith.constant 0 : index
    %17 = vector.load %arg6[%c0_12, %c0_13] : memref<32x32xbf16, #tpu.memory_space<vmem>>, vector<32x32xbf16>
    %c0_14 = arith.constant 0 : index
    %c0_15 = arith.constant 0 : index
    %18 = vector.load %arg7[%c0_14, %c0_15] : memref<1x32xf32, #tpu.memory_space<vmem>>, vector<1x32xf32>
    %19 = arith.truncf %16 : vector<16x32xf32> to vector<16x32xbf16>
    %cst_16 = arith.constant dense<0.000000e+00> : vector<16x32xf32>
    %20 = tpu.matmul %19, %17, %cst_16 {dimension_numbers = #tpu.dot_dimension_numbers<[1], [0], [0], [1], [0, 0, 1, 1], [], []>} : vector<16x32xbf16>, vector<32x32xbf16>, vector<16x32xf32> -> vector<16x32xf32>
    %21 = vector.broadcast %18 : vector<1x32xf32> to vector<16x32xf32>
    %22 = arith.addf %20, %21 : vector<16x32xf32>
    %cst_17 = arith.constant 0.000000e+00 : f32
    %23 = vector.broadcast %cst_17 : f32 to vector<16x32xf32>
    %24 = arith.maximumf %22, %23 : vector<16x32xf32>
    %c0_18 = arith.constant 0 : index
    %c0_19 = arith.constant 0 : index
    %25 = vector.load %arg8[%c0_18, %c0_19] : memref<16x32xf32, #tpu.memory_space<vmem>>, vector<16x32xf32>
    tpu.vector_store %arg8[%c0_18, %c0_19], %24 {strides = array<i32>} : memref<16x32xf32, #tpu.memory_space<vmem>>, vector<16x32xf32>,
    return
  }
  func.func @transform_0(%arg0: i32) -> (i32, i32) {
    %c0_i32 = arith.constant 0 : i32
    %c0_i32_0 = arith.constant 0 : i32
    return %arg0, %c0_i32 : i32, i32
  }
  func.func @transform_1(%arg0: i32) -> (i32, i32) {
    %c0_i32 = arith.constant 0 : i32
    %c0_i32_0 = arith.constant 0 : i32
    %c0_i32_1 = arith.constant 0 : i32
    return %c0_i32, %c0_i32_0 : i32, i32
  }
  func.func @transform_2(%arg0: i32) -> (i32, i32) {
    %c0_i32 = arith.constant 0 : i32
    %c0_i32_0 = arith.constant 0 : i32
    %c0_i32_1 = arith.constant 0 : i32
    return %c0_i32, %c0_i32_0 : i32, i32
  }
  func.func @transform_3(%arg0: i32) -> (i32, i32) {
    %c0_i32 = arith.constant 0 : i32
    %c0_i32_0 = arith.constant 0 : i32
    %c0_i32_1 = arith.constant 0 : i32
    return %c0_i32, %c0_i32_0 : i32, i32
  }
  func.func @transform_4(%arg0: i32) -> (i32, i32) {
    %c0_i32 = arith.constant 0 : i32
    %c0_i32_0 = arith.constant 0 : i32
    %c0_i32_1 = arith.constant 0 : i32
    return %c0_i32, %c0_i32_0 : i32, i32
  }
  func.func @transform_5(%arg0: i32) -> (i32, i32) {
    %c0_i32 = arith.constant 0 : i32
    %c0_i32_0 = arith.constant 0 : i32
    %c0_i32_1 = arith.constant 0 : i32
    return %c0_i32, %c0_i32_0 : i32, i32
  }
  func.func @transform_6(%arg0: i32) -> (i32, i32) {
    %c0_i32 = arith.constant 0 : i32
    %c0_i32_0 = arith.constant 0 : i32
    %c0_i32_1 = arith.constant 0 : i32
    return %c0_i32, %c0_i32_0 : i32, i32
  }
  func.func @transform_7(%arg0: i32) -> (i32, i32) {
    %c0_i32 = arith.constant 0 : i32
    %c0_i32_0 = arith.constant 0 : i32
    return %arg0, %c0_i32 : i32, i32
  }
}

module attributes {stable_mosaic.version = 11 : i64} {
  func.func @_head_kernel(%arg0: i32, %arg1: memref<24x16xf32, #tpu.memory_space<vmem>>, %arg2: memref<16x16xbf16, #tpu.memory_space<vmem>>, %arg3: memref<1x16xf32, #tpu.memory_space<vmem>>, %arg4: memref<16x32xbf16, #tpu.memory_space<vmem>>, %arg5: memref<1x32xf32, #tpu.memory_space<vmem>>, %arg6: memref<32x32xbf16, #tpu.memory_space<vmem>>, %arg7: memref<1x32xf32, #tpu.memory_space<vmem>>, %arg8: memref<24x32xf32, #tpu.memory_space<vmem>>) attributes {dimension_semantics = [#tpu.dimension_semantics<parallel>], iteration_bounds = array<i64: 1>, scalar_prefetch = 0 : i64, scratch_operands = 0 : i64, tpu.core_type = #tpu.core_type<tc>, window_params = [{transform_indices = @transform_0, window_bounds = array<i64: 24, 16>}, {pipeline_mode = #tpu.pipeline_mode<synchronous>, transform_indices = @transform_1, window_bounds = array<i64: 16, 16>}, {pipeline_mode = #tpu.pipeline_mode<synchronous>, transform_indices = @transform_2, window_bounds = array<i64: 1, 16>}, {pipeline_mode = #tpu.pipeline_mode<synchronous>, transform_indices = @transform_3, window_bounds = array<i64: 16, 32>}, {pipeline_mode = #tpu.pipeline_mode<synchronous>, transform_indices = @transform_4, window_bounds = array<i64: 1, 32>}, {pipeline_mode = #tpu.pipeline_mode<synchronous>, transform_indices = @transform_5, window_bounds = array<i64: 32, 32>}, {pipeline_mode = #tpu.pipeline_mode<synchronous>, transform_indices = @transform_6, window_bounds = array<i64: 1, 32>}, {transform_indices = @transform_7, window_bounds = array<i64: 24, 32>}]} {
    %c0 = arith.constant 0 : index
    %c0_0 = arith.constant 0 : index
    %0 = vector.load %arg1[%c0, %c0_0] : memref<24x16xf32, #tpu.memory_space<vmem>>, vector<24x16xf32>
    %c0_1 = arith.constant 0 : index
    %c0_2 = arith.constant 0 : index
    %1 = vector.load %arg2[%c0_1, %c0_2] : memref<16x16xbf16, #tpu.memory_space<vmem>>, vector<16x16xbf16>
    %c0_3 = arith.constant 0 : index
    %c0_4 = arith.constant 0 : index
    %2 = vector.load %arg3[%c0_3, %c0_4] : memref<1x16xf32, #tpu.memory_space<vmem>>, vector<1x16xf32>
    %3 = arith.truncf %0 : vector<24x16xf32> to vector<24x16xbf16>
    %cst = arith.constant dense<0.000000e+00> : vector<24x16xf32>
    %4 = tpu.matmul %3, %1, %cst {dimension_numbers = #tpu.dot_dimension_numbers<[1], [0], [0], [1], [0, 0, 1, 1], [], []>} : vector<24x16xbf16>, vector<16x16xbf16>, vector<24x16xf32> -> vector<24x16xf32>
    %5 = vector.broadcast %2 : vector<1x16xf32> to vector<24x16xf32>
    %6 = arith.addf %4, %5 : vector<24x16xf32>
    %cst_5 = arith.constant 0.000000e+00 : f32
    %7 = vector.broadcast %cst_5 : f32 to vector<24x16xf32>
    %8 = arith.maximumf %6, %7 : vector<24x16xf32>
    %c0_6 = arith.constant 0 : index
    %c0_7 = arith.constant 0 : index
    %9 = vector.load %arg4[%c0_6, %c0_7] : memref<16x32xbf16, #tpu.memory_space<vmem>>, vector<16x32xbf16>
    %c0_8 = arith.constant 0 : index
    %c0_9 = arith.constant 0 : index
    %10 = vector.load %arg5[%c0_8, %c0_9] : memref<1x32xf32, #tpu.memory_space<vmem>>, vector<1x32xf32>
    %11 = arith.truncf %8 : vector<24x16xf32> to vector<24x16xbf16>
    %cst_10 = arith.constant dense<0.000000e+00> : vector<24x32xf32>
    %12 = tpu.matmul %11, %9, %cst_10 {dimension_numbers = #tpu.dot_dimension_numbers<[1], [0], [0], [1], [0, 0, 1, 1], [], []>} : vector<24x16xbf16>, vector<16x32xbf16>, vector<24x32xf32> -> vector<24x32xf32>
    %13 = vector.broadcast %10 : vector<1x32xf32> to vector<24x32xf32>
    %14 = arith.addf %12, %13 : vector<24x32xf32>
    %cst_11 = arith.constant 0.000000e+00 : f32
    %15 = vector.broadcast %cst_11 : f32 to vector<24x32xf32>
    %16 = arith.maximumf %14, %15 : vector<24x32xf32>
    %c0_12 = arith.constant 0 : index
    %c0_13 = arith.constant 0 : index
    %17 = vector.load %arg6[%c0_12, %c0_13] : memref<32x32xbf16, #tpu.memory_space<vmem>>, vector<32x32xbf16>
    %c0_14 = arith.constant 0 : index
    %c0_15 = arith.constant 0 : index
    %18 = vector.load %arg7[%c0_14, %c0_15] : memref<1x32xf32, #tpu.memory_space<vmem>>, vector<1x32xf32>
    %19 = arith.truncf %16 : vector<24x32xf32> to vector<24x32xbf16>
    %cst_16 = arith.constant dense<0.000000e+00> : vector<24x32xf32>
    %20 = tpu.matmul %19, %17, %cst_16 {dimension_numbers = #tpu.dot_dimension_numbers<[1], [0], [0], [1], [0, 0, 1, 1], [], []>} : vector<24x32xbf16>, vector<32x32xbf16>, vector<24x32xf32> -> vector<24x32xf32>
    %21 = vector.broadcast %18 : vector<1x32xf32> to vector<24x32xf32>
    %22 = arith.addf %20, %21 : vector<24x32xf32>
    %cst_17 = arith.constant 0.000000e+00 : f32
    %23 = vector.broadcast %cst_17 : f32 to vector<24x32xf32>
    %24 = arith.maximumf %22, %23 : vector<24x32xf32>
    %c0_18 = arith.constant 0 : index
    %c0_19 = arith.constant 0 : index
    %25 = vector.load %arg8[%c0_18, %c0_19] : memref<24x32xf32, #tpu.memory_space<vmem>>, vector<24x32xf32>
    tpu.vector_store %arg8[%c0_18, %c0_19], %24 {strides = array<i32>} : memref<24x32xf32, #tpu.memory_space<vmem>>, vector<24x32xf32>,
    return
  }
  func.func @transform_0(%arg0: i32) -> (i32, i32) {
    %c0_i32 = arith.constant 0 : i32
    %c0_i32_0 = arith.constant 0 : i32
    return %arg0, %c0_i32 : i32, i32
  }
  func.func @transform_1(%arg0: i32) -> (i32, i32) {
    %c0_i32 = arith.constant 0 : i32
    %c0_i32_0 = arith.constant 0 : i32
    %c0_i32_1 = arith.constant 0 : i32
    return %c0_i32, %c0_i32_0 : i32, i32
  }
  func.func @transform_2(%arg0: i32) -> (i32, i32) {
    %c0_i32 = arith.constant 0 : i32
    %c0_i32_0 = arith.constant 0 : i32
    %c0_i32_1 = arith.constant 0 : i32
    return %c0_i32, %c0_i32_0 : i32, i32
  }
  func.func @transform_3(%arg0: i32) -> (i32, i32) {
    %c0_i32 = arith.constant 0 : i32
    %c0_i32_0 = arith.constant 0 : i32
    %c0_i32_1 = arith.constant 0 : i32
    return %c0_i32, %c0_i32_0 : i32, i32
  }
  func.func @transform_4(%arg0: i32) -> (i32, i32) {
    %c0_i32 = arith.constant 0 : i32
    %c0_i32_0 = arith.constant 0 : i32
    %c0_i32_1 = arith.constant 0 : i32
    return %c0_i32, %c0_i32_0 : i32, i32
  }
  func.func @transform_5(%arg0: i32) -> (i32, i32) {
    %c0_i32 = arith.constant 0 : i32
    %c0_i32_0 = arith.constant 0 : i32
    %c0_i32_1 = arith.constant 0 : i32
    return %c0_i32, %c0_i32_0 : i32, i32
  }
  func.func @transform_6(%arg0: i32) -> (i32, i32) {
    %c0_i32 = arith.constant 0 : i32
    %c0_i32_0 = arith.constant 0 : i32
    %c0_i32_1 = arith.constant 0 : i32
    return %c0_i32, %c0_i32_0 : i32, i32
  }
  func.func @transform_7(%arg0: i32) -> (i32, i32) {
    %c0_i32 = arith.constant 0 : i32
    %c0_i32_0 = arith.constant 0 : i32
    return %arg0, %c0_i32 : i32, i32
  }
}

module attributes {stable_mosaic.version = 11 : i64} {
  func.func @_gc_layer_kernel(%arg0: i32, %arg1: memref<16x32xf32, #tpu.memory_space<vmem>>, %arg2: memref<24x1xi32, #tpu.memory_space<vmem>>, %arg3: memref<1x24xi32, #tpu.memory_space<vmem>>, %arg4: memref<24x32xf32, #tpu.memory_space<vmem>>, %arg5: memref<24x1xf32, #tpu.memory_space<vmem>>, %arg6: memref<32x64xbf16, #tpu.memory_space<vmem>>, %arg7: memref<1x64xf32, #tpu.memory_space<vmem>>, %arg8: memref<64x32xbf16, #tpu.memory_space<vmem>>, %arg9: memref<1x32xf32, #tpu.memory_space<vmem>>, %arg10: memref<16x32xf32, #tpu.memory_space<vmem>>, %arg11: memref<16x32xf32, #tpu.memory_space<vmem>>, %arg12: memref<16x32xbf16, #tpu.memory_space<vmem>>) attributes {dimension_semantics = [#tpu.dimension_semantics<arbitrary>], iteration_bounds = array<i64: 1>, scalar_prefetch = 0 : i64, scratch_operands = 2 : i64, tpu.core_type = #tpu.core_type<tc>, window_params = [{pipeline_mode = #tpu.pipeline_mode<synchronous>, transform_indices = @transform_0, window_bounds = array<i64: 16, 32>}, {transform_indices = @transform_1, window_bounds = array<i64: 24, 1>}, {transform_indices = @transform_2, window_bounds = array<i64: 1, 24>}, {transform_indices = @transform_3, window_bounds = array<i64: 24, 32>}, {transform_indices = @transform_4, window_bounds = array<i64: 24, 1>}, {pipeline_mode = #tpu.pipeline_mode<synchronous>, transform_indices = @transform_5, window_bounds = array<i64: 32, 64>}, {pipeline_mode = #tpu.pipeline_mode<synchronous>, transform_indices = @transform_6, window_bounds = array<i64: 1, 64>}, {pipeline_mode = #tpu.pipeline_mode<synchronous>, transform_indices = @transform_7, window_bounds = array<i64: 64, 32>}, {pipeline_mode = #tpu.pipeline_mode<synchronous>, transform_indices = @transform_8, window_bounds = array<i64: 1, 32>}, {pipeline_mode = #tpu.pipeline_mode<synchronous>, transform_indices = @transform_9, window_bounds = array<i64: 16, 32>}]} {
    %c0_i32 = arith.constant 0 : i32
    %0 = arith.cmpi eq, %arg0, %c0_i32 : i32
    %1 = arith.extui %0 : i1 to i32
    %c0_i32_0 = arith.constant 0 : i32
    %2 = arith.cmpi ne, %1, %c0_i32_0 : i32
    scf.if %2 {
      %c0_18 = arith.constant 0 : index
      %c0_19 = arith.constant 0 : index
      %34 = vector.load %arg1[%c0_18, %c0_19] : memref<16x32xf32, #tpu.memory_space<vmem>>, vector<16x32xf32>
      %cst_20 = arith.constant 1.000000e+00 : f32
      %35 = vector.broadcast %cst_20 : f32 to vector<16x32xf32>
      %36 = arith.mulf %35, %34 : vector<16x32xf32>
      %c0_21 = arith.constant 0 : index
      %c0_22 = arith.constant 0 : index
      %37 = vector.load %arg11[%c0_21, %c0_22] : memref<16x32xf32, #tpu.memory_space<vmem>>, vector<16x32xf32>
      tpu.vector_store %arg11[%c0_21, %c0_22], %36 {strides = array<i32>} : memref<16x32xf32, #tpu.memory_space<vmem>>, vector<16x32xf32>,
      %c0_23 = arith.constant 0 : index
      %c0_24 = arith.constant 0 : index
      %38 = vector.load %arg1[%c0_23, %c0_24] : memref<16x32xf32, #tpu.memory_space<vmem>>, vector<16x32xf32>
      %39 = arith.truncf %38 : vector<16x32xf32> to vector<16x32xbf16>
      %c0_25 = arith.constant 0 : index
      %c0_26 = arith.constant 0 : index
      %40 = vector.load %arg12[%c0_25, %c0_26] : memref<16x32xbf16, #tpu.memory_space<vmem>>, vector<16x32xbf16>
      tpu.vector_store %arg12[%c0_25, %c0_26], %39 {strides = array<i32>} : memref<16x32xbf16, #tpu.memory_space<vmem>>, vector<16x32xbf16>,
    } else {
    }
    %c0 = arith.constant 0 : index
    %c0_1 = arith.constant 0 : index
    %3 = vector.load %arg2[%c0, %c0_1] : memref<24x1xi32, #tpu.memory_space<vmem>>, vector<24x1xi32>
    %4 = tpu.iota {dimensions = array<i32: 1>} : vector<24x16xi32>
    %5 = vector.broadcast %3 : vector<24x1xi32> to vector<24x16xi32>
    %6 = arith.cmpi eq, %4, %5 : vector<24x16xi32>
    %7 = arith.extui %6 : vector<24x16xi1> to vector<24x16xi32>
    %8 = arith.sitofp %7 : vector<24x16xi32> to vector<24x16xf32>
    %9 = arith.truncf %8 : vector<24x16xf32> to vector<24x16xbf16>
    %c0_2 = arith.constant 0 : index
    %c0_3 = arith.constant 0 : index
    %10 = vector.load %arg12[%c0_2, %c0_3] : memref<16x32xbf16, #tpu.memory_space<vmem>>, vector<16x32xbf16>
    %cst = arith.constant dense<0.000000e+00> : vector<24x32xf32>
    %11 = tpu.matmul %9, %10, %cst {dimension_numbers = #tpu.dot_dimension_numbers<[1], [0], [0], [1], [0, 0, 1, 1], [], []>} : vector<24x16xbf16>, vector<16x32xbf16>, vector<24x32xf32> -> vector<24x32xf32>
    %c0_4 = arith.constant 0 : index
    %c0_5 = arith.constant 0 : index
    %12 = vector.load %arg4[%c0_4, %c0_5] : memref<24x32xf32, #tpu.memory_space<vmem>>, vector<24x32xf32>
    %13 = arith.addf %11, %12 : vector<24x32xf32>
    %cst_6 = arith.constant 0.000000e+00 : f32
    %14 = vector.broadcast %cst_6 : f32 to vector<24x32xf32>
    %15 = arith.maximumf %13, %14 : vector<24x32xf32>
    %c0_7 = arith.constant 0 : index
    %c0_8 = arith.constant 0 : index
    %16 = vector.load %arg5[%c0_7, %c0_8] : memref<24x1xf32, #tpu.memory_space<vmem>>, vector<24x1xf32>
    %17 = vector.broadcast %16 : vector<24x1xf32> to vector<24x32xf32>
    %18 = arith.mulf %15, %17 : vector<24x32xf32>
    %c0_9 = arith.constant 0 : index
    %c0_10 = arith.constant 0 : index
    %19 = vector.load %arg3[%c0_9, %c0_10] : memref<1x24xi32, #tpu.memory_space<vmem>>, vector<1x24xi32>
    %20 = tpu.iota {dimensions = array<i32: 0>} : vector<16x24xi32>
    %21 = vector.broadcast %19 : vector<1x24xi32> to vector<16x24xi32>
    %22 = arith.cmpi eq, %20, %21 : vector<16x24xi32>
    %23 = arith.extui %22 : vector<16x24xi1> to vector<16x24xi32>
    %24 = arith.sitofp %23 : vector<16x24xi32> to vector<16x24xf32>
    %25 = arith.truncf %24 : vector<16x24xf32> to vector<16x24xbf16>
    %c0_11 = arith.constant 0 : index
    %c0_12 = arith.constant 0 : index
    %26 = vector.load %arg11[%c0_11, %c0_12] : memref<16x32xf32, #tpu.memory_space<vmem>>, vector<16x32xf32>
    %27 = arith.truncf %18 : vector<24x32xf32> to vector<24x32xbf16>
    %cst_13 = arith.constant dense<0.000000e+00> : vector<16x32xf32>
    %28 = tpu.matmul %25, %27, %cst_13 {dimension_numbers = #tpu.dot_dimension_numbers<[1], [0], [0], [1], [0, 0, 1, 1], [], []>} : vector<16x24xbf16>, vector<24x32xbf16>, vector<16x32xf32> -> vector<16x32xf32>
    %29 = arith.addf %26, %28 : vector<16x32xf32>
    %c0_14 = arith.constant 0 : index
    %c0_15 = arith.constant 0 : index
    %30 = vector.load %arg11[%c0_14, %c0_15] : memref<16x32xf32, #tpu.memory_space<vmem>>, vector<16x32xf32>
    tpu.vector_store %arg11[%c0_14, %c0_15], %29 {strides = array<i32>} : memref<16x32xf32, #tpu.memory_space<vmem>>, vector<16x32xf32>,
    %c0_i32_16 = arith.constant 0 : i32
    %31 = arith.cmpi eq, %arg0, %c0_i32_16 : i32
    %32 = arith.extui %31 : i1 to i32
    %c0_i32_17 = arith.constant 0 : i32
    %33 = arith.cmpi ne, %32, %c0_i32_17 : i32
    scf.if %33 {
      %c0_18 = arith.constant 0 : index
      %c0_19 = arith.constant 0 : index
      %34 = vector.load %arg11[%c0_18, %c0_19] : memref<16x32xf32, #tpu.memory_space<vmem>>, vector<16x32xf32>
      %35 = arith.truncf %34 : vector<16x32xf32> to vector<16x32xbf16>
      %c0_20 = arith.constant 0 : index
      %c0_21 = arith.constant 0 : index
      %36 = vector.load %arg6[%c0_20, %c0_21] : memref<32x64xbf16, #tpu.memory_space<vmem>>, vector<32x64xbf16>
      %cst_22 = arith.constant dense<0.000000e+00> : vector<16x64xf32>
      %37 = tpu.matmul %35, %36, %cst_22 {dimension_numbers = #tpu.dot_dimension_numbers<[1], [0], [0], [1], [0, 0, 1, 1], [], []>} : vector<16x32xbf16>, vector<32x64xbf16>, vector<16x64xf32> -> vector<16x64xf32>
      %c0_23 = arith.constant 0 : index
      %c0_24 = arith.constant 0 : index
      %38 = vector.load %arg7[%c0_23, %c0_24] : memref<1x64xf32, #tpu.memory_space<vmem>>, vector<1x64xf32>
      %39 = vector.broadcast %38 : vector<1x64xf32> to vector<16x64xf32>
      %40 = arith.addf %37, %39 : vector<16x64xf32>
      %cst_25 = arith.constant 0.000000e+00 : f32
      %41 = vector.broadcast %cst_25 : f32 to vector<16x64xf32>
      %42 = arith.maximumf %40, %41 : vector<16x64xf32>
      %43 = arith.truncf %42 : vector<16x64xf32> to vector<16x64xbf16>
      %c0_26 = arith.constant 0 : index
      %c0_27 = arith.constant 0 : index
      %44 = vector.load %arg8[%c0_26, %c0_27] : memref<64x32xbf16, #tpu.memory_space<vmem>>, vector<64x32xbf16>
      %cst_28 = arith.constant dense<0.000000e+00> : vector<16x32xf32>
      %45 = tpu.matmul %43, %44, %cst_28 {dimension_numbers = #tpu.dot_dimension_numbers<[1], [0], [0], [1], [0, 0, 1, 1], [], []>} : vector<16x64xbf16>, vector<64x32xbf16>, vector<16x32xf32> -> vector<16x32xf32>
      %c0_29 = arith.constant 0 : index
      %c0_30 = arith.constant 0 : index
      %46 = vector.load %arg9[%c0_29, %c0_30] : memref<1x32xf32, #tpu.memory_space<vmem>>, vector<1x32xf32>
      %47 = vector.broadcast %46 : vector<1x32xf32> to vector<16x32xf32>
      %48 = arith.addf %45, %47 : vector<16x32xf32>
      %c0_31 = arith.constant 0 : index
      %c0_32 = arith.constant 0 : index
      %49 = vector.load %arg10[%c0_31, %c0_32] : memref<16x32xf32, #tpu.memory_space<vmem>>, vector<16x32xf32>
      tpu.vector_store %arg10[%c0_31, %c0_32], %48 {strides = array<i32>} : memref<16x32xf32, #tpu.memory_space<vmem>>, vector<16x32xf32>,
    } else {
    }
    return
  }
  func.func @transform_0(%arg0: i32) -> (i32, i32) {
    %c0_i32 = arith.constant 0 : i32
    %c0_i32_0 = arith.constant 0 : i32
    %c0_i32_1 = arith.constant 0 : i32
    return %c0_i32, %c0_i32_0 : i32, i32
  }
  func.func @transform_1(%arg0: i32) -> (i32, i32) {
    %c0_i32 = arith.constant 0 : i32
    %c0_i32_0 = arith.constant 0 : i32
    return %arg0, %c0_i32 : i32, i32
  }
  func.func @transform_2(%arg0: i32) -> (i32, i32) {
    %c0_i32 = arith.constant 0 : i32
    %c0_i32_0 = arith.constant 0 : i32
    return %c0_i32, %arg0 : i32, i32
  }
  func.func @transform_3(%arg0: i32) -> (i32, i32) {
    %c0_i32 = arith.constant 0 : i32
    %c0_i32_0 = arith.constant 0 : i32
    return %arg0, %c0_i32 : i32, i32
  }
  func.func @transform_4(%arg0: i32) -> (i32, i32) {
    %c0_i32 = arith.constant 0 : i32
    %c0_i32_0 = arith.constant 0 : i32
    return %arg0, %c0_i32 : i32, i32
  }
  func.func @transform_5(%arg0: i32) -> (i32, i32) {
    %c0_i32 = arith.constant 0 : i32
    %c0_i32_0 = arith.constant 0 : i32
    %c0_i32_1 = arith.constant 0 : i32
    return %c0_i32, %c0_i32_0 : i32, i32
  }
  func.func @transform_6(%arg0: i32) -> (i32, i32) {
    %c0_i32 = arith.constant 0 : i32
    %c0_i32_0 = arith.constant 0 : i32
    %c0_i32_1 = arith.constant 0 : i32
    return %c0_i32, %c0_i32_0 : i32, i32
  }
  func.func @transform_7(%arg0: i32) -> (i32, i32) {
    %c0_i32 = arith.constant 0 : i32
    %c0_i32_0 = arith.constant 0 : i32
    %c0_i32_1 = arith.constant 0 : i32
    return %c0_i32, %c0_i32_0 : i32, i32
  }
  func.func @transform_8(%arg0: i32) -> (i32, i32) {
    %c0_i32 = arith.constant 0 : i32
    %c0_i32_0 = arith.constant 0 : i32
    %c0_i32_1 = arith.constant 0 : i32
    return %c0_i32, %c0_i32_0 : i32, i32
  }
  func.func @transform_9(%arg0: i32) -> (i32, i32) {
    %c0_i32 = arith.constant 0 : i32
    %c0_i32_0 = arith.constant 0 : i32
    %c0_i32_1 = arith.constant 0 : i32
    return %c0_i32, %c0_i32_0 : i32, i32
  }
}

module attributes {stable_mosaic.version = 11 : i64} {
  func.func @_gc_layer_kernel(%arg0: i32, %arg1: memref<16x32xf32, #tpu.memory_space<vmem>>, %arg2: memref<24x1xi32, #tpu.memory_space<vmem>>, %arg3: memref<1x24xi32, #tpu.memory_space<vmem>>, %arg4: memref<24x32xf32, #tpu.memory_space<vmem>>, %arg5: memref<24x1xf32, #tpu.memory_space<vmem>>, %arg6: memref<32x64xbf16, #tpu.memory_space<vmem>>, %arg7: memref<1x64xf32, #tpu.memory_space<vmem>>, %arg8: memref<64x32xbf16, #tpu.memory_space<vmem>>, %arg9: memref<1x32xf32, #tpu.memory_space<vmem>>, %arg10: memref<16x32xf32, #tpu.memory_space<vmem>>, %arg11: memref<16x32xf32, #tpu.memory_space<vmem>>, %arg12: memref<16x32xbf16, #tpu.memory_space<vmem>>) attributes {dimension_semantics = [#tpu.dimension_semantics<arbitrary>], iteration_bounds = array<i64: 1>, scalar_prefetch = 0 : i64, scratch_operands = 2 : i64, tpu.core_type = #tpu.core_type<tc>, window_params = [{pipeline_mode = #tpu.pipeline_mode<synchronous>, transform_indices = @transform_0, window_bounds = array<i64: 16, 32>}, {transform_indices = @transform_1, window_bounds = array<i64: 24, 1>}, {transform_indices = @transform_2, window_bounds = array<i64: 1, 24>}, {transform_indices = @transform_3, window_bounds = array<i64: 24, 32>}, {transform_indices = @transform_4, window_bounds = array<i64: 24, 1>}, {pipeline_mode = #tpu.pipeline_mode<synchronous>, transform_indices = @transform_5, window_bounds = array<i64: 32, 64>}, {pipeline_mode = #tpu.pipeline_mode<synchronous>, transform_indices = @transform_6, window_bounds = array<i64: 1, 64>}, {pipeline_mode = #tpu.pipeline_mode<synchronous>, transform_indices = @transform_7, window_bounds = array<i64: 64, 32>}, {pipeline_mode = #tpu.pipeline_mode<synchronous>, transform_indices = @transform_8, window_bounds = array<i64: 1, 32>}, {pipeline_mode = #tpu.pipeline_mode<synchronous>, transform_indices = @transform_9, window_bounds = array<i64: 16, 32>}]} {
    %c0_i32 = arith.constant 0 : i32
    %0 = arith.cmpi eq, %arg0, %c0_i32 : i32
    %1 = arith.extui %0 : i1 to i32
    %c0_i32_0 = arith.constant 0 : i32
    %2 = arith.cmpi ne, %1, %c0_i32_0 : i32
    scf.if %2 {
      %c0_18 = arith.constant 0 : index
      %c0_19 = arith.constant 0 : index
      %34 = vector.load %arg1[%c0_18, %c0_19] : memref<16x32xf32, #tpu.memory_space<vmem>>, vector<16x32xf32>
      %cst_20 = arith.constant 1.000000e+00 : f32
      %35 = vector.broadcast %cst_20 : f32 to vector<16x32xf32>
      %36 = arith.mulf %35, %34 : vector<16x32xf32>
      %c0_21 = arith.constant 0 : index
      %c0_22 = arith.constant 0 : index
      %37 = vector.load %arg11[%c0_21, %c0_22] : memref<16x32xf32, #tpu.memory_space<vmem>>, vector<16x32xf32>
      tpu.vector_store %arg11[%c0_21, %c0_22], %36 {strides = array<i32>} : memref<16x32xf32, #tpu.memory_space<vmem>>, vector<16x32xf32>,
      %c0_23 = arith.constant 0 : index
      %c0_24 = arith.constant 0 : index
      %38 = vector.load %arg1[%c0_23, %c0_24] : memref<16x32xf32, #tpu.memory_space<vmem>>, vector<16x32xf32>
      %39 = arith.truncf %38 : vector<16x32xf32> to vector<16x32xbf16>
      %c0_25 = arith.constant 0 : index
      %c0_26 = arith.constant 0 : index
      %40 = vector.load %arg12[%c0_25, %c0_26] : memref<16x32xbf16, #tpu.memory_space<vmem>>, vector<16x32xbf16>
      tpu.vector_store %arg12[%c0_25, %c0_26], %39 {strides = array<i32>} : memref<16x32xbf16, #tpu.memory_space<vmem>>, vector<16x32xbf16>,
    } else {
    }
    %c0 = arith.constant 0 : index
    %c0_1 = arith.constant 0 : index
    %3 = vector.load %arg2[%c0, %c0_1] : memref<24x1xi32, #tpu.memory_space<vmem>>, vector<24x1xi32>
    %4 = tpu.iota {dimensions = array<i32: 1>} : vector<24x16xi32>
    %5 = vector.broadcast %3 : vector<24x1xi32> to vector<24x16xi32>
    %6 = arith.cmpi eq, %4, %5 : vector<24x16xi32>
    %7 = arith.extui %6 : vector<24x16xi1> to vector<24x16xi32>
    %8 = arith.sitofp %7 : vector<24x16xi32> to vector<24x16xf32>
    %9 = arith.truncf %8 : vector<24x16xf32> to vector<24x16xbf16>
    %c0_2 = arith.constant 0 : index
    %c0_3 = arith.constant 0 : index
    %10 = vector.load %arg12[%c0_2, %c0_3] : memref<16x32xbf16, #tpu.memory_space<vmem>>, vector<16x32xbf16>
    %cst = arith.constant dense<0.000000e+00> : vector<24x32xf32>
    %11 = tpu.matmul %9, %10, %cst {dimension_numbers = #tpu.dot_dimension_numbers<[1], [0], [0], [1], [0, 0, 1, 1], [], []>} : vector<24x16xbf16>, vector<16x32xbf16>, vector<24x32xf32> -> vector<24x32xf32>
    %c0_4 = arith.constant 0 : index
    %c0_5 = arith.constant 0 : index
    %12 = vector.load %arg4[%c0_4, %c0_5] : memref<24x32xf32, #tpu.memory_space<vmem>>, vector<24x32xf32>
    %13 = arith.addf %11, %12 : vector<24x32xf32>
    %cst_6 = arith.constant 0.000000e+00 : f32
    %14 = vector.broadcast %cst_6 : f32 to vector<24x32xf32>
    %15 = arith.maximumf %13, %14 : vector<24x32xf32>
    %c0_7 = arith.constant 0 : index
    %c0_8 = arith.constant 0 : index
    %16 = vector.load %arg5[%c0_7, %c0_8] : memref<24x1xf32, #tpu.memory_space<vmem>>, vector<24x1xf32>
    %17 = vector.broadcast %16 : vector<24x1xf32> to vector<24x32xf32>
    %18 = arith.mulf %15, %17 : vector<24x32xf32>
    %c0_9 = arith.constant 0 : index
    %c0_10 = arith.constant 0 : index
    %19 = vector.load %arg3[%c0_9, %c0_10] : memref<1x24xi32, #tpu.memory_space<vmem>>, vector<1x24xi32>
    %20 = tpu.iota {dimensions = array<i32: 0>} : vector<16x24xi32>
    %21 = vector.broadcast %19 : vector<1x24xi32> to vector<16x24xi32>
    %22 = arith.cmpi eq, %20, %21 : vector<16x24xi32>
    %23 = arith.extui %22 : vector<16x24xi1> to vector<16x24xi32>
    %24 = arith.sitofp %23 : vector<16x24xi32> to vector<16x24xf32>
    %25 = arith.truncf %24 : vector<16x24xf32> to vector<16x24xbf16>
    %c0_11 = arith.constant 0 : index
    %c0_12 = arith.constant 0 : index
    %26 = vector.load %arg11[%c0_11, %c0_12] : memref<16x32xf32, #tpu.memory_space<vmem>>, vector<16x32xf32>
    %27 = arith.truncf %18 : vector<24x32xf32> to vector<24x32xbf16>
    %cst_13 = arith.constant dense<0.000000e+00> : vector<16x32xf32>
    %28 = tpu.matmul %25, %27, %cst_13 {dimension_numbers = #tpu.dot_dimension_numbers<[1], [0], [0], [1], [0, 0, 1, 1], [], []>} : vector<16x24xbf16>, vector<24x32xbf16>, vector<16x32xf32> -> vector<16x32xf32>
    %29 = arith.addf %26, %28 : vector<16x32xf32>
    %c0_14 = arith.constant 0 : index
    %c0_15 = arith.constant 0 : index
    %30 = vector.load %arg11[%c0_14, %c0_15] : memref<16x32xf32, #tpu.memory_space<vmem>>, vector<16x32xf32>
    tpu.vector_store %arg11[%c0_14, %c0_15], %29 {strides = array<i32>} : memref<16x32xf32, #tpu.memory_space<vmem>>, vector<16x32xf32>,
    %c0_i32_16 = arith.constant 0 : i32
    %31 = arith.cmpi eq, %arg0, %c0_i32_16 : i32
    %32 = arith.extui %31 : i1 to i32
    %c0_i32_17 = arith.constant 0 : i32
    %33 = arith.cmpi ne, %32, %c0_i32_17 : i32
    scf.if %33 {
      %c0_18 = arith.constant 0 : index
      %c0_19 = arith.constant 0 : index
      %34 = vector.load %arg11[%c0_18, %c0_19] : memref<16x32xf32, #tpu.memory_space<vmem>>, vector<16x32xf32>
      %35 = arith.truncf %34 : vector<16x32xf32> to vector<16x32xbf16>
      %c0_20 = arith.constant 0 : index
      %c0_21 = arith.constant 0 : index
      %36 = vector.load %arg6[%c0_20, %c0_21] : memref<32x64xbf16, #tpu.memory_space<vmem>>, vector<32x64xbf16>
      %cst_22 = arith.constant dense<0.000000e+00> : vector<16x64xf32>
      %37 = tpu.matmul %35, %36, %cst_22 {dimension_numbers = #tpu.dot_dimension_numbers<[1], [0], [0], [1], [0, 0, 1, 1], [], []>} : vector<16x32xbf16>, vector<32x64xbf16>, vector<16x64xf32> -> vector<16x64xf32>
      %c0_23 = arith.constant 0 : index
      %c0_24 = arith.constant 0 : index
      %38 = vector.load %arg7[%c0_23, %c0_24] : memref<1x64xf32, #tpu.memory_space<vmem>>, vector<1x64xf32>
      %39 = vector.broadcast %38 : vector<1x64xf32> to vector<16x64xf32>
      %40 = arith.addf %37, %39 : vector<16x64xf32>
      %cst_25 = arith.constant 0.000000e+00 : f32
      %41 = vector.broadcast %cst_25 : f32 to vector<16x64xf32>
      %42 = arith.maximumf %40, %41 : vector<16x64xf32>
      %43 = arith.truncf %42 : vector<16x64xf32> to vector<16x64xbf16>
      %c0_26 = arith.constant 0 : index
      %c0_27 = arith.constant 0 : index
      %44 = vector.load %arg8[%c0_26, %c0_27] : memref<64x32xbf16, #tpu.memory_space<vmem>>, vector<64x32xbf16>
      %cst_28 = arith.constant dense<0.000000e+00> : vector<16x32xf32>
      %45 = tpu.matmul %43, %44, %cst_28 {dimension_numbers = #tpu.dot_dimension_numbers<[1], [0], [0], [1], [0, 0, 1, 1], [], []>} : vector<16x64xbf16>, vector<64x32xbf16>, vector<16x32xf32> -> vector<16x32xf32>
      %c0_29 = arith.constant 0 : index
      %c0_30 = arith.constant 0 : index
      %46 = vector.load %arg9[%c0_29, %c0_30] : memref<1x32xf32, #tpu.memory_space<vmem>>, vector<1x32xf32>
      %47 = vector.broadcast %46 : vector<1x32xf32> to vector<16x32xf32>
      %48 = arith.addf %45, %47 : vector<16x32xf32>
      %cst_31 = arith.constant 0.000000e+00 : f32
      %49 = vector.broadcast %cst_31 : f32 to vector<16x32xf32>
      %50 = arith.maximumf %48, %49 : vector<16x32xf32>
      %c0_32 = arith.constant 0 : index
      %c0_33 = arith.constant 0 : index
      %51 = vector.load %arg10[%c0_32, %c0_33] : memref<16x32xf32, #tpu.memory_space<vmem>>, vector<16x32xf32>
      tpu.vector_store %arg10[%c0_32, %c0_33], %50 {strides = array<i32>} : memref<16x32xf32, #tpu.memory_space<vmem>>, vector<16x32xf32>,
    } else {
    }
    return
  }
  func.func @transform_0(%arg0: i32) -> (i32, i32) {
    %c0_i32 = arith.constant 0 : i32
    %c0_i32_0 = arith.constant 0 : i32
    %c0_i32_1 = arith.constant 0 : i32
    return %c0_i32, %c0_i32_0 : i32, i32
  }
  func.func @transform_1(%arg0: i32) -> (i32, i32) {
    %c0_i32 = arith.constant 0 : i32
    %c0_i32_0 = arith.constant 0 : i32
    return %arg0, %c0_i32 : i32, i32
  }
  func.func @transform_2(%arg0: i32) -> (i32, i32) {
    %c0_i32 = arith.constant 0 : i32
    %c0_i32_0 = arith.constant 0 : i32
    return %c0_i32, %arg0 : i32, i32
  }
  func.func @transform_3(%arg0: i32) -> (i32, i32) {
    %c0_i32 = arith.constant 0 : i32
    %c0_i32_0 = arith.constant 0 : i32
    return %arg0, %c0_i32 : i32, i32
  }
  func.func @transform_4(%arg0: i32) -> (i32, i32) {
    %c0_i32 = arith.constant 0 : i32
    %c0_i32_0 = arith.constant 0 : i32
    return %arg0, %c0_i32 : i32, i32
  }
  func.func @transform_5(%arg0: i32) -> (i32, i32) {
    %c0_i32 = arith.constant 0 : i32
    %c0_i32_0 = arith.constant 0 : i32
    %c0_i32_1 = arith.constant 0 : i32
    return %c0_i32, %c0_i32_0 : i32, i32
  }
  func.func @transform_6(%arg0: i32) -> (i32, i32) {
    %c0_i32 = arith.constant 0 : i32
    %c0_i32_0 = arith.constant 0 : i32
    %c0_i32_1 = arith.constant 0 : i32
    return %c0_i32, %c0_i32_0 : i32, i32
  }
  func.func @transform_7(%arg0: i32) -> (i32, i32) {
    %c0_i32 = arith.constant 0 : i32
    %c0_i32_0 = arith.constant 0 : i32
    %c0_i32_1 = arith.constant 0 : i32
    return %c0_i32, %c0_i32_0 : i32, i32
  }
  func.func @transform_8(%arg0: i32) -> (i32, i32) {
    %c0_i32 = arith.constant 0 : i32
    %c0_i32_0 = arith.constant 0 : i32
    %c0_i32_1 = arith.constant 0 : i32
    return %c0_i32, %c0_i32_0 : i32, i32
  }
  func.func @transform_9(%arg0: i32) -> (i32, i32) {
    %c0_i32 = arith.constant 0 : i32
    %c0_i32_0 = arith.constant 0 : i32
    %c0_i32_1 = arith.constant 0 : i32
    return %c0_i32, %c0_i32_0 : i32, i32
  }
}

module attributes {stable_mosaic.version = 11 : i64} {
  func.func @_pool_out_kernel(%arg0: memref<16x32xf32, #tpu.memory_space<vmem>>, %arg1: memref<1x16xi32, #tpu.memory_space<vmem>>, %arg2: memref<32x32xbf16, #tpu.memory_space<vmem>>, %arg3: memref<1x32xf32, #tpu.memory_space<vmem>>, %arg4: memref<32x32xbf16, #tpu.memory_space<vmem>>, %arg5: memref<1x32xf32, #tpu.memory_space<vmem>>, %arg6: memref<2x32xf32, #tpu.memory_space<vmem>>) attributes {dimension_semantics = [], scalar_prefetch = 0 : i64, scratch_operands = 0 : i64, tpu.core_type = #tpu.core_type<tc>} {
    %c0 = arith.constant 0 : index
    %c0_0 = arith.constant 0 : index
    %0 = vector.load %arg1[%c0, %c0_0] : memref<1x16xi32, #tpu.memory_space<vmem>>, vector<1x16xi32>
    %1 = tpu.iota {dimensions = array<i32: 0>} : vector<2x16xi32>
    %2 = vector.broadcast %0 : vector<1x16xi32> to vector<2x16xi32>
    %3 = arith.cmpi eq, %1, %2 : vector<2x16xi32>
    %4 = arith.extui %3 : vector<2x16xi1> to vector<2x16xi32>
    %5 = arith.sitofp %4 : vector<2x16xi32> to vector<2x16xf32>
    %6 = arith.truncf %5 : vector<2x16xf32> to vector<2x16xbf16>
    %c0_1 = arith.constant 0 : index
    %c0_2 = arith.constant 0 : index
    %7 = vector.load %arg0[%c0_1, %c0_2] : memref<16x32xf32, #tpu.memory_space<vmem>>, vector<16x32xf32>
    %8 = arith.truncf %7 : vector<16x32xf32> to vector<16x32xbf16>
    %cst = arith.constant dense<0.000000e+00> : vector<2x32xf32>
    %9 = tpu.matmul %6, %8, %cst {dimension_numbers = #tpu.dot_dimension_numbers<[1], [0], [0], [1], [0, 0, 1, 1], [], []>} : vector<2x16xbf16>, vector<16x32xbf16>, vector<2x32xf32> -> vector<2x32xf32>
    %10 = arith.mulf %9, %9 : vector<2x32xf32>
    %cst_3 = arith.constant dense<0.000000e+00> : vector<2xf32>
    %11 = vector.multi_reduction <add>, %10, %cst_3 [1] : vector<2x32xf32> to vector<2xf32>
    %12 = vector.shape_cast %11 : vector<2xf32> to vector<2x1xf32>
    %cst_4 = arith.constant 1.000000e-24 : f32
    %13 = vector.broadcast %cst_4 : f32 to vector<2x1xf32>
    %14 = arith.addf %12, %13 : vector<2x1xf32>
    %15 = math.rsqrt %14 : vector<2x1xf32>
    %16 = vector.broadcast %15 : vector<2x1xf32> to vector<2x32xf32>
    %17 = arith.mulf %9, %16 : vector<2x32xf32>
    %18 = arith.truncf %17 : vector<2x32xf32> to vector<2x32xbf16>
    %c0_5 = arith.constant 0 : index
    %c0_6 = arith.constant 0 : index
    %19 = vector.load %arg2[%c0_5, %c0_6] : memref<32x32xbf16, #tpu.memory_space<vmem>>, vector<32x32xbf16>
    %cst_7 = arith.constant dense<0.000000e+00> : vector<2x32xf32>
    %20 = tpu.matmul %18, %19, %cst_7 {dimension_numbers = #tpu.dot_dimension_numbers<[1], [0], [0], [1], [0, 0, 1, 1], [], []>} : vector<2x32xbf16>, vector<32x32xbf16>, vector<2x32xf32> -> vector<2x32xf32>
    %c0_8 = arith.constant 0 : index
    %c0_9 = arith.constant 0 : index
    %21 = vector.load %arg3[%c0_8, %c0_9] : memref<1x32xf32, #tpu.memory_space<vmem>>, vector<1x32xf32>
    %22 = vector.broadcast %21 : vector<1x32xf32> to vector<2x32xf32>
    %23 = arith.addf %20, %22 : vector<2x32xf32>
    %cst_10 = arith.constant 0.000000e+00 : f32
    %24 = vector.broadcast %cst_10 : f32 to vector<2x32xf32>
    %25 = arith.maximumf %23, %24 : vector<2x32xf32>
    %26 = arith.truncf %25 : vector<2x32xf32> to vector<2x32xbf16>
    %c0_11 = arith.constant 0 : index
    %c0_12 = arith.constant 0 : index
    %27 = vector.load %arg4[%c0_11, %c0_12] : memref<32x32xbf16, #tpu.memory_space<vmem>>, vector<32x32xbf16>
    %cst_13 = arith.constant dense<0.000000e+00> : vector<2x32xf32>
    %28 = tpu.matmul %26, %27, %cst_13 {dimension_numbers = #tpu.dot_dimension_numbers<[1], [0], [0], [1], [0, 0, 1, 1], [], []>} : vector<2x32xbf16>, vector<32x32xbf16>, vector<2x32xf32> -> vector<2x32xf32>
    %c0_14 = arith.constant 0 : index
    %c0_15 = arith.constant 0 : index
    %29 = vector.load %arg5[%c0_14, %c0_15] : memref<1x32xf32, #tpu.memory_space<vmem>>, vector<1x32xf32>
    %30 = vector.broadcast %29 : vector<1x32xf32> to vector<2x32xf32>
    %31 = arith.addf %28, %30 : vector<2x32xf32>
    %c0_16 = arith.constant 0 : index
    %c0_17 = arith.constant 0 : index
    %32 = vector.load %arg6[%c0_16, %c0_17] : memref<2x32xf32, #tpu.memory_space<vmem>>, vector<2x32xf32>
    tpu.vector_store %arg6[%c0_16, %c0_17], %31 {strides = array<i32>} : memref<2x32xf32, #tpu.memory_space<vmem>>, vector<2x32xf32>,
    return
  }
}

</mosaic_0001>

<llo_original>
// kernel: featured_transfer_forward.5
$region0: #{featured_transfer_forward.5}
  #allocation0 [shape = 'u32[]', space=smem, size = 0x4, offset = 0x4, fixed_abs, tag = 'smem constant byte address 0x4 - core index']
  #allocation1 [shape = 'u32[144,128]{1,0:T(1,128)}', space=vmem, size = 0x12000, scoped, tag = 'internal scratch']
  %s0 = inlined_call_operand.vmem [shape: f32[16,16], index: 0, kind: input, shape index: {}]
  %s1 = inlined_call_operand.vmem [shape: bf16[16,16], index: 1, kind: input, shape index: {}]
  %s2 = inlined_call_operand.vmem [shape: f32[1,16], index: 2, kind: input, shape index: {}]
  %s3 = inlined_call_operand.vmem [shape: bf16[16,32], index: 3, kind: input, shape index: {}]
  %s4 = inlined_call_operand.vmem [shape: f32[1,32], index: 4, kind: input, shape index: {}]
  %s5 = inlined_call_operand.vmem [shape: bf16[32,32], index: 5, kind: input, shape index: {}]
  %s6 = inlined_call_operand.vmem [shape: f32[1,32], index: 6, kind: input, shape index: {}]
  %s7 = inlined_call_operand.vmem [shape: f32[16,32], index: 7, kind: output, shape index: {}]
  %s8 = sld [smem:[#allocation0]]
  $region38: #{featured_transfer_forward.5} parent=0
    _
  %s10 = ssub.s32 1, %s8
  %s11 = scalar_select 0, %s10, %s8
  // Predicated region
  $region2: #{featured_transfer_forward.5} parent=0 // pred_check
    _
  $region3: #{featured_transfer_forward.5} parent=0 // pred_check_branch
    %13 = sbr.rel (0) target = $region5
  $region4: #{featured_transfer_forward.5} parent=0 // pred_region
    _
  $region5: #{featured_transfer_forward.5} parent=0 // pred_fallthru
    _
  // Predicated region
  $region6: #{featured_transfer_forward.5} parent=0 // pred_check
    _
  $region7: #{featured_transfer_forward.5} parent=0 // pred_check_branch
    %15 = sbr.rel (0) target = $region9
  $region8: #{featured_transfer_forward.5} parent=0 // pred_region
    _
  $region9: #{featured_transfer_forward.5} parent=0 // pred_fallthru
    _
  // Predicated region
  $region10: #{featured_transfer_forward.5} parent=0 // pred_check
    _
  $region11: #{featured_transfer_forward.5} parent=0 // pred_check_branch
    %17 = sbr.rel (0) target = $region13
  $region12: #{featured_transfer_forward.5} parent=0 // pred_region
    _
  $region13: #{featured_transfer_forward.5} parent=0 // pred_fallthru
    _
  // Predicated region
  $region14: #{featured_transfer_forward.5} parent=0 // pred_check
    _
  $region15: #{featured_transfer_forward.5} parent=0 // pred_check_branch
    %19 = sbr.rel (0) target = $region17
  $region16: #{featured_transfer_forward.5} parent=0 // pred_region
    _
  $region17: #{featured_transfer_forward.5} parent=0 // pred_fallthru
    _
  // Predicated region
  $region18: #{featured_transfer_forward.5} parent=0 // pred_check
    _
  $region19: #{featured_transfer_forward.5} parent=0 // pred_check_branch
    %21 = sbr.rel (0) target = $region21
  $region20: #{featured_transfer_forward.5} parent=0 // pred_region
    _
  $region21: #{featured_transfer_forward.5} parent=0 // pred_fallthru
    _
  // Predicated region
  $region22: #{featured_transfer_forward.5} parent=0 // pred_check
    _
  $region23: #{featured_transfer_forward.5} parent=0 // pred_check_branch
    %23 = sbr.rel (0) target = $region25
  $region24: #{featured_transfer_forward.5} parent=0 // pred_region
    _
  $region25: #{featured_transfer_forward.5} parent=0 // pred_fallthru
    _
  // Predicated region
  $region26: #{featured_transfer_forward.5} parent=0 // pred_check
    _
  $region27: #{featured_transfer_forward.5} parent=0 // pred_check_branch
    %25 = sbr.rel (0) target = $region29
  $region28: #{featured_transfer_forward.5} parent=0 // pred_region
    _
  $region29: #{featured_transfer_forward.5} parent=0 // pred_fallthru
    _
  %v27 = vld [vmem:[%s0] sm:$0xff]
  %v28 = vld [vmem:[%s0 + $0x8] sm:$0xff]
  %v29 = vld [vmem:[%s1] sm:$0xf]
  %v30 = vld [vmem:[%s1 + $0x4] sm:$0xf]
  %v31 = vld [vmem:[%s2] sm:$0x1]
  %v32 = vpack.c.bf16 %v28, %v27
  %v34 = vlaneseq
  %v35 = vshrl.u32 %v34, 7
  %v36 = vsub.s32 0, %v35
  %v37 = vrot.slane %v31, %v36
  %v41 = vunpack.c.l.b16 %v29
  %v42 = vunpack.c.l.b16 %v30
  %v43 = vpack.c.b16 %v42, %v41
  %vm45 = vcmask 130048
  %v47 = vsel %vm45, %v32, 0
  %49 = vmatprep.subr.bf16.mxu0 0
  %50 = vmatpush1.bf16.msra.mxu0 %v43
  %51 = vmatprep.subr.bf16.mxu0 0
  %52 = vmatpush1.bf16.msra.mxu0 0
  %53 = vmatprep.subr.bf16.mxu0 0
  %54 = vmatpush1.bf16.msra.mxu0 0
  %55 = vmatprep.subr.bf16.mxu0 0
  %56 = vmatpush1.bf16.msra.mxu0 0
  %57 = vmatprep.subr.bf16.mxu0 0
  %58 = vmatpush1.bf16.msra.mxu0 0
  %59 = vmatprep.subr.bf16.mxu0 0
  %60 = vmatpush1.bf16.msra.mxu0 0
  %61 = vmatprep.subr.bf16.mxu0 0
  %62 = vmatpush1.bf16.msra.mxu0 0
  %63 = vmatprep.subr.bf16.mxu0 0
  %64 = vmatpush1.bf16.msra.mxu0 0
  %65 = vmatprep.subr.bf16.mxu0 0
  %66 = vmatpush1.bf16.msra.mxu0 0
  %67 = vmatprep.subr.bf16.mxu0 0
  %68 = vmatpush1.bf16.msra.mxu0 0
  %69 = vmatprep.subr.bf16.mxu0 0
  %70 = vmatpush1.bf16.msra.mxu0 0
  %71 = vmatprep.subr.bf16.mxu0 0
  %72 = vmatpush1.bf16.msra.mxu0 0
  %73 = vmatprep.subr.bf16.mxu0 0
  %74 = vmatpush1.bf16.msra.mxu0 0
  %75 = vmatprep.subr.bf16.mxu0 0
  %76 = vmatpush1.bf16.msra.mxu0 0
  %77 = vmatprep.subr.bf16.mxu0 0
  %78 = vmatpush1.bf16.msra.mxu0 0
  %79 = vmatprep.subr.bf16.mxu0 0
  %80 = vmatpush1.bf16.msra.mxu0 0
  %81 = vmatprep.mubr.bf16.mxu0 0
  %82 = vmatmul.mubr.bf16.gmra.mrb[0].mxu0 %v47
  %v83 = vpop.f32.mrb[0].mxu0
  %v84 = vadd.f32 %v37, %v83
  %v85 = vpop.f32.mrb[0].mxu0
  %v86 = vpop.f32.mrb[0].mxu0
  %v87 = vadd.f32 %v37, %v86
  %v88 = vpop.f32.mrb[0].mxu0
  %89 = vdwg.mxu0
  %v90 = vmax.f32 %v84, 0.0
  %v91 = vmax.f32 %v87, 0.0
  %v92 = vld [vmem:[%s3] sm:$0xf]
  %v93 = vld [vmem:[%s3 + $0x4] sm:$0xf]
  %v94 = vld [vmem:[%s4] sm:$0x1]
  %v95 = vpack.c.bf16 %v91, %v90
  %v97 = vlaneseq
  %v98 = vshrl.u32 %v97, 7
  %v99 = vsub.s32 0, %v98
  %v100 = vrot.slane %v94, %v99
  %v104 = vunpack.c.l.b16 %v92
  %v105 = vunpack.c.l.b16 %v93
  %v106 = vpack.c.b16 %v105, %v104
  %v109 = vsel %vm45, %v95, 0
  %111 = vmatprep.subr.bf16.mxu0 0
  %112 = vmatpush1.bf16.msra.mxu0 %v106
  %113 = vmatprep.subr.bf16.mxu0 0
  %114 = vmatpush1.bf16.msra.mxu0 0
  %115 = vmatprep.subr.bf16.mxu0 0
  %116 = vmatpush1.bf16.msra.mxu0 0
  %117 = vmatprep.subr.bf16.mxu0 0
  %118 = vmatpush1.bf16.msra.mxu0 0
  %119 = vmatprep.subr.bf16.mxu0 0
  %120 = vmatpush1.bf16.msra.mxu0 0
  %121 = vmatprep.subr.bf16.mxu0 0
  %122 = vmatpush1.bf16.msra.mxu0 0
  %123 = vmatprep.subr.bf16.mxu0 0
  %124 = vmatpush1.bf16.msra.mxu0 0
  %125 = vmatprep.subr.bf16.mxu0 0
  %126 = vmatpush1.bf16.msra.mxu0 0
  %127 = vmatprep.subr.bf16.mxu0 0
  %128 = vmatpush1.bf16.msra.mxu0 0
  %129 = vmatprep.subr.bf16.mxu0 0
  %130 = vmatpush1.bf16.msra.mxu0 0
  %131 = vmatprep.subr.bf16.mxu0 0
  %132 = vmatpush1.bf16.msra.mxu0 0
  %133 = vmatprep.subr.bf16.mxu0 0
  %134 = vmatpush1.bf16.msra.mxu0 0
  %135 = vmatprep.subr.bf16.mxu0 0
  %136 = vmatpush1.bf16.msra.mxu0 0
  %137 = vmatprep.subr.bf16.mxu0 0
  %138 = vmatpush1.bf16.msra.mxu0 0
  %139 = vmatprep.subr.bf16.mxu0 0
  %140 = vmatpush1.bf16.msra.mxu0 0
  %141 = vmatprep.subr.bf16.mxu0 0
  %142 = vmatpush1.bf16.msra.mxu0 0
  %143 = vmatprep.mubr.bf16.mxu0 0
  %144 = vmatmul.mubr.bf16.gmra.mrb[0].mxu0 %v109
  %v145 = vpop.f32.mrb[0].mxu0
  %v146 = vadd.f32 %v100, %v145
  %v147 = vpop.f32.mrb[0].mxu0
  %v148 = vpop.f32.mrb[0].mxu0
  %v149 = vadd.f32 %v100, %v148
  %v150 = vpop.f32.mrb[0].mxu0
  %151 = vdwg.mxu0
  %v152 = vmax.f32 %v146, 0.0
  %v153 = vmax.f32 %v149, 0.0
  %v154 = vld [vmem:[%s5] sm:$0xf]
  %v155 = vld [vmem:[%s5 + $0x4] sm:$0xf]
  %v156 = vld [vmem:[%s5 + $0x8] sm:$0xf]
  %v157 = vld [vmem:[%s5 + $0xc] sm:$0xf]
  %v158 = vld [vmem:[%s6] sm:$0x1]
  %v159 = vpack.c.bf16 %v153, %v152
  %v161 = vlaneseq
  %v162 = vshrl.u32 %v161, 7
  %v163 = vsub.s32 0, %v162
  %v164 = vrot.slane %v158, %v163
  %v170 = vunpack.c.l.b16 %v154
  %v171 = vunpack.c.l.b16 %v155
  %v172 = vunpack.c.l.b16 %v156
  %v173 = vunpack.c.l.b16 %v157
  %v174 = vpack.c.b16 %v171, %v170
  %v175 = vpack.c.b16 %v173, %v172
  %vm178 = vcmask 261120
  %v180 = vsel %vm178, %v159, 0
  %182 = vmatprep.subr.bf16.mxu0 0
  %183 = vmatpush1.bf16.msra.mxu0 %v174
  %184 = vmatprep.subr.bf16.mxu0 0
  %185 = vmatpush1.bf16.msra.mxu0 %v175
  %186 = vmatprep.subr.bf16.mxu0 0
  %187 = vmatpush1.bf16.msra.mxu0 0
  %188 = vmatprep.subr.bf16.mxu0 0
  %189 = vmatpush1.bf16.msra.mxu0 0
  %190 = vmatprep.subr.bf16.mxu0 0
  %191 = vmatpush1.bf16.msra.mxu0 0
  %192 = vmatprep.subr.bf16.mxu0 0
  %193 = vmatpush1.bf16.msra.mxu0 0
  %194 = vmatprep.subr.bf16.mxu0 0
  %195 = vmatpush1.bf16.msra.mxu0 0
  %196 = vmatprep.subr.bf16.mxu0 0
  %197 = vmatpush1.bf16.msra.mxu0 0
  %198 = vmatprep.subr.bf16.mxu0 0
  %199 = vmatpush1.bf16.msra.mxu0 0
  %200 = vmatprep.subr.bf16.mxu0 0
  %201 = vmatpush1.bf16.msra.mxu0 0
  %202 = vmatprep.subr.bf16.mxu0 0
  %203 = vmatpush1.bf16.msra.mxu0 0
  %204 = vmatprep.subr.bf16.mxu0 0
  %205 = vmatpush1.bf16.msra.mxu0 0
  %206 = vmatprep.subr.bf16.mxu0 0
  %207 = vmatpush1.bf16.msra.mxu0 0
  %208 = vmatprep.subr.bf16.mxu0 0
  %209 = vmatpush1.bf16.msra.mxu0 0
  %210 = vmatprep.subr.bf16.mxu0 0
  %211 = vmatpush1.bf16.msra.mxu0 0
  %212 = vmatprep.subr.bf16.mxu0 0
  %213 = vmatpush1.bf16.msra.mxu0 0
  %214 = vmatprep.mubr.bf16.mxu0 0
  %215 = vmatmul.mubr.bf16.gmra.mrb[0].mxu0 %v180
  %v216 = vpop.f32.mrb[0].mxu0
  %v217 = vadd.f32 %v164, %v216
  %v218 = vpop.f32.mrb[0].mxu0
  %v219 = vpop.f32.mrb[0].mxu0
  %v220 = vadd.f32 %v164, %v219
  %v221 = vpop.f32.mrb[0].mxu0
  %222 = vdwg.mxu0
  %v223 = vmax.f32 %v217, 0.0
  %v224 = vmax.f32 %v220, 0.0
  %225 = vst.msk [vmem:[%s7] sm:$0xff] %vm178, %v223
  %226 = vst.msk [vmem:[%s7 + $0x8] sm:$0xff] %vm178, %v224
  // Predicated region
  $region30: #{featured_transfer_forward.5} parent=0 // pred_check
    _
  $region31: #{featured_transfer_forward.5} parent=0 // pred_check_branch
    %228 = sbr.rel (0) target = $region33
  $region32: #{featured_transfer_forward.5} parent=0 // pred_region
    _
  $region33: #{featured_transfer_forward.5} parent=0 // pred_fallthru
    _
  // Predicated region
  $region34: #{featured_transfer_forward.5} parent=0 // pred_check
    _
  $region35: #{featured_transfer_forward.5} parent=0 // pred_check_branch
    %230 = sbr.rel (0) target = $region37
  $region36: #{featured_transfer_forward.5} parent=0 // pred_region
    _
  $region37: #{featured_transfer_forward.5} parent=0 // pred_fallthru
    _

// kernel: featured_transfer_forward.6
$region0: #{featured_transfer_forward.6}
  #allocation0 [shape = 'u32[]', space=smem, size = 0x4, offset = 0x4, fixed_abs, tag = 'smem constant byte address 0x4 - core index']
  #allocation1 [shape = 'u32[144,128]{1,0:T(1,128)}', space=vmem, size = 0x12000, scoped, tag = 'internal scratch']
  %s0 = inlined_call_operand.vmem [shape: f32[24,16], index: 0, kind: input, shape index: {}]
  %s1 = inlined_call_operand.vmem [shape: bf16[16,16], index: 1, kind: input, shape index: {}]
  %s2 = inlined_call_operand.vmem [shape: f32[1,16], index: 2, kind: input, shape index: {}]
  %s3 = inlined_call_operand.vmem [shape: bf16[16,32], index: 3, kind: input, shape index: {}]
  %s4 = inlined_call_operand.vmem [shape: f32[1,32], index: 4, kind: input, shape index: {}]
  %s5 = inlined_call_operand.vmem [shape: bf16[32,32], index: 5, kind: input, shape index: {}]
  %s6 = inlined_call_operand.vmem [shape: f32[1,32], index: 6, kind: input, shape index: {}]
  %s7 = inlined_call_operand.vmem [shape: f32[24,32], index: 7, kind: output, shape index: {}]
  %s8 = sld [smem:[#allocation0]]
  $region38: #{featured_transfer_forward.6} parent=0
    _
  %s10 = ssub.s32 1, %s8
  %s11 = scalar_select 0, %s10, %s8
  // Predicated region
  $region2: #{featured_transfer_forward.6} parent=0 // pred_check
    _
  $region3: #{featured_transfer_forward.6} parent=0 // pred_check_branch
    %13 = sbr.rel (0) target = $region5
  $region4: #{featured_transfer_forward.6} parent=0 // pred_region
    _
  $region5: #{featured_transfer_forward.6} parent=0 // pred_fallthru
    _
  // Predicated region
  $region6: #{featured_transfer_forward.6} parent=0 // pred_check
    _
  $region7: #{featured_transfer_forward.6} parent=0 // pred_check_branch
    %15 = sbr.rel (0) target = $region9
  $region8: #{featured_transfer_forward.6} parent=0 // pred_region
    _
  $region9: #{featured_transfer_forward.6} parent=0 // pred_fallthru
    _
  // Predicated region
  $region10: #{featured_transfer_forward.6} parent=0 // pred_check
    _
  $region11: #{featured_transfer_forward.6} parent=0 // pred_check_branch
    %17 = sbr.rel (0) target = $region13
  $region12: #{featured_transfer_forward.6} parent=0 // pred_region
    _
  $region13: #{featured_transfer_forward.6} parent=0 // pred_fallthru
    _
  // Predicated region
  $region14: #{featured_transfer_forward.6} parent=0 // pred_check
    _
  $region15: #{featured_transfer_forward.6} parent=0 // pred_check_branch
    %19 = sbr.rel (0) target = $region17
  $region16: #{featured_transfer_forward.6} parent=0 // pred_region
    _
  $region17: #{featured_transfer_forward.6} parent=0 // pred_fallthru
    _
  // Predicated region
  $region18: #{featured_transfer_forward.6} parent=0 // pred_check
    _
  $region19: #{featured_transfer_forward.6} parent=0 // pred_check_branch
    %21 = sbr.rel (0) target = $region21
  $region20: #{featured_transfer_forward.6} parent=0 // pred_region
    _
  $region21: #{featured_transfer_forward.6} parent=0 // pred_fallthru
    _
  // Predicated region
  $region22: #{featured_transfer_forward.6} parent=0 // pred_check
    _
  $region23: #{featured_transfer_forward.6} parent=0 // pred_check_branch
    %23 = sbr.rel (0) target = $region25
  $region24: #{featured_transfer_forward.6} parent=0 // pred_region
    _
  $region25: #{featured_transfer_forward.6} parent=0 // pred_fallthru
    _
  // Predicated region
  $region26: #{featured_transfer_forward.6} parent=0 // pred_check
    _
  $region27: #{featured_transfer_forward.6} parent=0 // pred_check_branch
    %25 = sbr.rel (0) target = $region29
  $region28: #{featured_transfer_forward.6} parent=0 // pred_region
    _
  $region29: #{featured_transfer_forward.6} parent=0 // pred_fallthru
    _
  %v27 = vld [vmem:[%s0] sm:$0xff]
  %v28 = vld [vmem:[%s0 + $0x8] sm:$0xff]
  %v29 = vld [vmem:[%s0 + $0x10] sm:$0xff]
  %v30 = vld [vmem:[%s1] sm:$0xf]
  %v31 = vld [vmem:[%s1 + $0x4] sm:$0xf]
  %v32 = vld [vmem:[%s2] sm:$0x1]
  %v33 = vpack.c.bf16 %v28, %v27
  %v34 = vpack.c.bf16 %v29, %v29
  %v36 = vlaneseq
  %v37 = vshrl.u32 %v36, 7
  %v38 = vsub.s32 0, %v37
  %v39 = vrot.slane %v32, %v38
  %v43 = vunpack.c.l.b16 %v30
  %v44 = vunpack.c.l.b16 %v31
  %v45 = vpack.c.b16 %v44, %v43
  %vm47 = vcmask 130048
  %v49 = vsel %vm47, %v33, 0
  %v52 = vsel %vm47, %v34, 0
  %54 = vmatprep.subr.bf16.mxu0 0
  %55 = vmatpush1.bf16.msra.mxu0 %v45
  %56 = vmatprep.subr.bf16.mxu0 0
  %57 = vmatpush1.bf16.msra.mxu0 0
  %58 = vmatprep.subr.bf16.mxu0 0
  %59 = vmatpush1.bf16.msra.mxu0 0
  %60 = vmatprep.subr.bf16.mxu0 0
  %61 = vmatpush1.bf16.msra.mxu0 0
  %62 = vmatprep.subr.bf16.mxu0 0
  %63 = vmatpush1.bf16.msra.mxu0 0
  %64 = vmatprep.subr.bf16.mxu0 0
  %65 = vmatpush1.bf16.msra.mxu0 0
  %66 = vmatprep.subr.bf16.mxu0 0
  %67 = vmatpush1.bf16.msra.mxu0 0
  %68 = vmatprep.subr.bf16.mxu0 0
  %69 = vmatpush1.bf16.msra.mxu0 0
  %70 = vmatprep.subr.bf16.mxu0 0
  %71 = vmatpush1.bf16.msra.mxu0 0
  %72 = vmatprep.subr.bf16.mxu0 0
  %73 = vmatpush1.bf16.msra.mxu0 0
  %74 = vmatprep.subr.bf16.mxu0 0
  %75 = vmatpush1.bf16.msra.mxu0 0
  %76 = vmatprep.subr.bf16.mxu0 0
  %77 = vmatpush1.bf16.msra.mxu0 0
  %78 = vmatprep.subr.bf16.mxu0 0
  %79 = vmatpush1.bf16.msra.mxu0 0
  %80 = vmatprep.subr.bf16.mxu0 0
  %81 = vmatpush1.bf16.msra.mxu0 0
  %82 = vmatprep.subr.bf16.mxu0 0
  %83 = vmatpush1.bf16.msra.mxu0 0
  %84 = vmatprep.subr.bf16.mxu0 0
  %85 = vmatpush1.bf16.msra.mxu0 0
  %86 = vmatprep.mubr.bf16.mxu0 0
  %87 = vmatmul.mubr.bf16.gmra.mrb[0].mxu0 %v49
  %v88 = vpop.f32.mrb[0].mxu0
  %v89 = vadd.f32 %v39, %v88
  %v90 = vpop.f32.mrb[0].mxu0
  %v91 = vpop.f32.mrb[0].mxu0
  %v92 = vadd.f32 %v39, %v91
  %v93 = vpop.f32.mrb[0].mxu0
  %94 = vmatprep.mubr.bf16.mxu0 0
  %95 = vmatmul.mubr.bf16.gmra.mrb[0].mxu0 %v52
  %v96 = vpop.f32.mrb[0].mxu0
  %v97 = vadd.f32 %v39, %v96
  %v98 = vpop.f32.mrb[0].mxu0
  %v99 = vpop.f32.mrb[0].mxu0
  %v100 = vpop.f32.mrb[0].mxu0
  %101 = vdwg.mxu0
  %v102 = vmax.f32 %v89, 0.0
  %v103 = vmax.f32 %v92, 0.0
  %v104 = vmax.f32 %v97, 0.0
  %v105 = vld [vmem:[%s3] sm:$0xf]
  %v106 = vld [vmem:[%s3 + $0x4] sm:$0xf]
  %v107 = vld [vmem:[%s4] sm:$0x1]
  %v108 = vpack.c.bf16 %v103, %v102
  %v109 = vpack.c.bf16 %v104, %v104
  %v111 = vlaneseq
  %v112 = vshrl.u32 %v111, 7
  %v113 = vsub.s32 0, %v112
  %v114 = vrot.slane %v107, %v113
  %v118 = vunpack.c.l.b16 %v105
  %v119 = vunpack.c.l.b16 %v106
  %v120 = vpack.c.b16 %v119, %v118
  %v123 = vsel %vm47, %v108, 0
  %v126 = vsel %vm47, %v109, 0
  %128 = vmatprep.subr.bf16.mxu0 0
  %129 = vmatpush1.bf16.msra.mxu0 %v120
  %130 = vmatprep.subr.bf16.mxu0 0
  %131 = vmatpush1.bf16.msra.mxu0 0
  %132 = vmatprep.subr.bf16.mxu0 0
  %133 = vmatpush1.bf16.msra.mxu0 0
  %134 = vmatprep.subr.bf16.mxu0 0
  %135 = vmatpush1.bf16.msra.mxu0 0
  %136 = vmatprep.subr.bf16.mxu0 0
  %137 = vmatpush1.bf16.msra.mxu0 0
  %138 = vmatprep.subr.bf16.mxu0 0
  %139 = vmatpush1.bf16.msra.mxu0 0
  %140 = vmatprep.subr.bf16.mxu0 0
  %141 = vmatpush1.bf16.msra.mxu0 0
  %142 = vmatprep.subr.bf16.mxu0 0
  %143 = vmatpush1.bf16.msra.mxu0 0
  %144 = vmatprep.subr.bf16.mxu0 0
  %145 = vmatpush1.bf16.msra.mxu0 0
  %146 = vmatprep.subr.bf16.mxu0 0
  %147 = vmatpush1.bf16.msra.mxu0 0
  %148 = vmatprep.subr.bf16.mxu0 0
  %149 = vmatpush1.bf16.msra.mxu0 0
  %150 = vmatprep.subr.bf16.mxu0 0
  %151 = vmatpush1.bf16.msra.mxu0 0
  %152 = vmatprep.subr.bf16.mxu0 0
  %153 = vmatpush1.bf16.msra.mxu0 0
  %154 = vmatprep.subr.bf16.mxu0 0
  %155 = vmatpush1.bf16.msra.mxu0 0
  %156 = vmatprep.subr.bf16.mxu0 0
  %157 = vmatpush1.bf16.msra.mxu0 0
  %158 = vmatprep.subr.bf16.mxu0 0
  %159 = vmatpush1.bf16.msra.mxu0 0
  %160 = vmatprep.mubr.bf16.mxu0 0
  %161 = vmatmul.mubr.bf16.gmra.mrb[0].mxu0 %v123
  %v162 = vpop.f32.mrb[0].mxu0
  %v163 = vadd.f32 %v114, %v162
  %v164 = vpop.f32.mrb[0].mxu0
  %v165 = vpop.f32.mrb[0].mxu0
  %v166 = vadd.f32 %v114, %v165
  %v167 = vpop.f32.mrb[0].mxu0
  %168 = vmatprep.mubr.bf16.mxu0 0
  %169 = vmatmul.mubr.bf16.gmra.mrb[0].mxu0 %v126
  %v170 = vpop.f32.mrb[0].mxu0
  %v171 = vadd.f32 %v114, %v170
  %v172 = vpop.f32.mrb[0].mxu0
  %v173 = vpop.f32.mrb[0].mxu0
  %v174 = vpop.f32.mrb[0].mxu0
  %175 = vdwg.mxu0
  %v176 = vmax.f32 %v163, 0.0
  %v177 = vmax.f32 %v166, 0.0
  %v178 = vmax.f32 %v171, 0.0
  %v179 = vld [vmem:[%s5] sm:$0xf]
  %v180 = vld [vmem:[%s5 + $0x4] sm:$0xf]
  %v181 = vld [vmem:[%s5 + $0x8] sm:$0xf]
  %v182 = vld [vmem:[%s5 + $0xc] sm:$0xf]
  %v183 = vld [vmem:[%s6] sm:$0x1]
  %v184 = vpack.c.bf16 %v177, %v176
  %v185 = vpack.c.bf16 %v178, %v178
  %v187 = vlaneseq
  %v188 = vshrl.u32 %v187, 7
  %v189 = vsub.s32 0, %v188
  %v190 = vrot.slane %v183, %v189
  %v196 = vunpack.c.l.b16 %v179
  %v197 = vunpack.c.l.b16 %v180
  %v198 = vunpack.c.l.b16 %v181
  %v199 = vunpack.c.l.b16 %v182
  %v200 = vpack.c.b16 %v197, %v196
  %v201 = vpack.c.b16 %v199, %v198
  %vm204 = vcmask 261120
  %v206 = vsel %vm204, %v184, 0
  %v209 = vsel %vm204, %v185, 0
  %211 = vmatprep.subr.bf16.mxu0 0
  %212 = vmatpush1.bf16.msra.mxu0 %v200
  %213 = vmatprep.subr.bf16.mxu0 0
  %214 = vmatpush1.bf16.msra.mxu0 %v201
  %215 = vmatprep.subr.bf16.mxu0 0
  %216 = vmatpush1.bf16.msra.mxu0 0
  %217 = vmatprep.subr.bf16.mxu0 0
  %218 = vmatpush1.bf16.msra.mxu0 0
  %219 = vmatprep.subr.bf16.mxu0 0
  %220 = vmatpush1.bf16.msra.mxu0 0
  %221 = vmatprep.subr.bf16.mxu0 0
  %222 = vmatpush1.bf16.msra.mxu0 0
  %223 = vmatprep.subr.bf16.mxu0 0
  %224 = vmatpush1.bf16.msra.mxu0 0
  %225 = vmatprep.subr.bf16.mxu0 0
  %226 = vmatpush1.bf16.msra.mxu0 0
  %227 = vmatprep.subr.bf16.mxu0 0
  %228 = vmatpush1.bf16.msra.mxu0 0
  %229 = vmatprep.subr.bf16.mxu0 0
  %230 = vmatpush1.bf16.msra.mxu0 0
  %231 = vmatprep.subr.bf16.mxu0 0
  %232 = vmatpush1.bf16.msra.mxu0 0
  %233 = vmatprep.subr.bf16.mxu0 0
  %234 = vmatpush1.bf16.msra.mxu0 0
  %235 = vmatprep.subr.bf16.mxu0 0
  %236 = vmatpush1.bf16.msra.mxu0 0
  %237 = vmatprep.subr.bf16.mxu0 0
  %238 = vmatpush1.bf16.msra.mxu0 0
  %239 = vmatprep.subr.bf16.mxu0 0
  %240 = vmatpush1.bf16.msra.mxu0 0
  %241 = vmatprep.subr.bf16.mxu0 0
  %242 = vmatpush1.bf16.msra.mxu0 0
  %243 = vmatprep.mubr.bf16.mxu0 0
  %244 = vmatmul.mubr.bf16.gmra.mrb[0].mxu0 %v206
  %v245 = vpop.f32.mrb[0].mxu0
  %v246 = vadd.f32 %v190, %v245
  %v247 = vpop.f32.mrb[0].mxu0
  %v248 = vpop.f32.mrb[0].mxu0
  %v249 = vadd.f32 %v190, %v248
  %v250 = vpop.f32.mrb[0].mxu0
  %251 = vmatprep.mubr.bf16.mxu0 0
  %252 = vmatmul.mubr.bf16.gmra.mrb[0].mxu0 %v209
  %v253 = vpop.f32.mrb[0].mxu0
  %v254 = vadd.f32 %v190, %v253
  %v255 = vpop.f32.mrb[0].mxu0
  %v256 = vpop.f32.mrb[0].mxu0
  %v257 = vpop.f32.mrb[0].mxu0
  %258 = vdwg.mxu0
  %v259 = vmax.f32 %v246, 0.0
  %v260 = vmax.f32 %v249, 0.0
  %v261 = vmax.f32 %v254, 0.0
  %262 = vst.msk [vmem:[%s7] sm:$0xff] %vm204, %v259
  %263 = vst.msk [vmem:[%s7 + $0x8] sm:$0xff] %vm204, %v260
  %264 = vst.msk [vmem:[%s7 + $0x10] sm:$0xff] %vm204, %v261
  // Predicated region
  $region30: #{featured_transfer_forward.6} parent=0 // pred_check
    _
  $region31: #{featured_transfer_forward.6} parent=0 // pred_check_branch
    %266 = sbr.rel (0) target = $region33
  $region32: #{featured_transfer_forward.6} parent=0 // pred_region
    _
  $region33: #{featured_transfer_forward.6} parent=0 // pred_fallthru
    _
  // Predicated region
  $region34: #{featured_transfer_forward.6} parent=0 // pred_check
    _
  $region35: #{featured_transfer_forward.6} parent=0 // pred_check_branch
    %268 = sbr.rel (0) target = $region37
  $region36: #{featured_transfer_forward.6} parent=0 // pred_region
    _
  $region37: #{featured_transfer_forward.6} parent=0 // pred_fallthru
    _

// kernel: featured_transfer_forward.8
$region0: #{featured_transfer_forward.8}
  #allocation0 [shape = 'u32[]', space=smem, size = 0x4, offset = 0x4, fixed_abs, tag = 'smem constant byte address 0x4 - core index']
  #allocation1 [shape = 'u32[144,128]{1,0:T(1,128)}', space=vmem, size = 0x12000, scoped, tag = 'internal scratch']
  #allocation2 [shape = 'f32[16,32]{1,0:T(8,128)}', space=vmem, size = 0x2000, scoped, tag = 'scratch operand']
  #allocation3 [shape = 'bf16[16,32]{1,0:T(16,128)(2,1)}', space=vmem, size = 0x1000, scoped, tag = 'scratch operand']
  %s0 = inlined_call_operand.vmem [shape: f32[16,32], index: 0, kind: input, shape index: {}]
  %s1 = inlined_call_operand.vmem [shape: s32[24,1], index: 1, kind: input, shape index: {}]
  %s2 = inlined_call_operand.vmem [shape: s32[1,24], index: 2, kind: input, shape index: {}]
  %s3 = inlined_call_operand.vmem [shape: f32[24,32], index: 3, kind: input, shape index: {}]
  %s4 = inlined_call_operand.vmem [shape: f32[24,1], index: 4, kind: input, shape index: {}]
  %s5 = inlined_call_operand.vmem [shape: bf16[32,64], index: 5, kind: input, shape index: {}]
  %s6 = inlined_call_operand.vmem [shape: f32[1,64], index: 6, kind: input, shape index: {}]
  %s7 = inlined_call_operand.vmem [shape: bf16[64,32], index: 7, kind: input, shape index: {}]
  %s8 = inlined_call_operand.vmem [shape: f32[1,32], index: 8, kind: input, shape index: {}]
  %s9 = inlined_call_operand.vmem [shape: f32[16,32], index: 9, kind: output, shape index: {}]
  %s10 = sld [smem:[#allocation0]]
  $region54: #{featured_transfer_forward.8} parent=0
    _
  %s12 = ssub.s32 1, %s10
  %s13 = scalar_select 0, %s12, %s10
  // Predicated region
  $region2: #{featured_transfer_forward.8} parent=0 // pred_check
    _
  $region3: #{featured_transfer_forward.8} parent=0 // pred_check_branch
    %15 = sbr.rel (0) target = $region5
  $region4: #{featured_transfer_forward.8} parent=0 // pred_region
    _
  $region5: #{featured_transfer_forward.8} parent=0 // pred_fallthru
    _
  // Predicated region
  $region6: #{featured_transfer_forward.8} parent=0 // pred_check
    _
  $region7: #{featured_transfer_forward.8} parent=0 // pred_check_branch
    %17 = sbr.rel (0) target = $region9
  $region8: #{featured_transfer_forward.8} parent=0 // pred_region
    _
  $region9: #{featured_transfer_forward.8} parent=0 // pred_fallthru
    _
  // Predicated region
  $region10: #{featured_transfer_forward.8} parent=0 // pred_check
    _
  $region11: #{featured_transfer_forward.8} parent=0 // pred_check_branch
    %19 = sbr.rel (0) target = $region13
  $region12: #{featured_transfer_forward.8} parent=0 // pred_region
    _
  $region13: #{featured_transfer_forward.8} parent=0 // pred_fallthru
    _
  // Predicated region
  $region14: #{featured_transfer_forward.8} parent=0 // pred_check
    _
  $region15: #{featured_transfer_forward.8} parent=0 // pred_check_branch
    %21 = sbr.rel (0) target = $region17
  $region16: #{featured_transfer_forward.8} parent=0 // pred_region
    _
  $region17: #{featured_transfer_forward.8} parent=0 // pred_fallthru
    _
  // Predicated region
  $region18: #{featured_transfer_forward.8} parent=0 // pred_check
    _
  $region19: #{featured_transfer_forward.8} parent=0 // pred_check_branch
    %23 = sbr.rel (0) target = $region21
  $region20: #{featured_transfer_forward.8} parent=0 // pred_region
    _
  $region21: #{featured_transfer_forward.8} parent=0 // pred_fallthru
    _
  // Predicated region
  $region22: #{featured_transfer_forward.8} parent=0 // pred_check
    _
  $region23: #{featured_transfer_forward.8} parent=0 // pred_check_branch
    %25 = sbr.rel (0) target = $region25
  $region24: #{featured_transfer_forward.8} parent=0 // pred_region
    _
  $region25: #{featured_transfer_forward.8} parent=0 // pred_fallthru
    _
  // Predicated region
  $region26: #{featured_transfer_forward.8} parent=0 // pred_check
    _
  $region27: #{featured_transfer_forward.8} parent=0 // pred_check_branch
    %27 = sbr.rel (0) target = $region29
  $region28: #{featured_transfer_forward.8} parent=0 // pred_region
    _
  $region29: #{featured_transfer_forward.8} parent=0 // pred_fallthru
    _
  // Predicated region
  $region30: #{featured_transfer_forward.8} parent=0 // pred_check
    _
  $region31: #{featured_transfer_forward.8} parent=0 // pred_check_branch
    %29 = sbr.rel (0) target = $region33
  $region32: #{featured_transfer_forward.8} parent=0 // pred_region
    _
  $region33: #{featured_transfer_forward.8} parent=0 // pred_fallthru
    _
  // Predicated region
  $region34: #{featured_transfer_forward.8} parent=0 // pred_check
    _
  $region35: #{featured_transfer_forward.8} parent=0 // pred_check_branch
    %31 = sbr.rel (0) target = $region37
  $region36: #{featured_transfer_forward.8} parent=0 // pred_region
    _
  $region37: #{featured_transfer_forward.8} parent=0 // pred_fallthru
    _
  %p33 = scmp.eq.s32.totalorder 0, 0
  // Predicated region
  $region38: #{featured_transfer_forward.8} parent=0 // pred_check
    %p34 = pneg %p33
  $region39: #{featured_transfer_forward.8} parent=0 // pred_check_branch
    %36 = sbr.rel (%p34) target = $region41
  $region40: #{featured_transfer_forward.8} parent=0 // pred_region
    %v37 = vld [vmem:[%s0] sm:$0xff]
    %v38 = vld [vmem:[%s0 + $0x8] sm:$0xff]
    %vm39 = vcmask 261120
    %40 = vst.msk [vmem:[#allocation2] sm:$0xff] %vm39, %v37
    %41 = vst.msk [vmem:[#allocation2 + $0x8] sm:$0xff] %vm39, %v38
    %v42 = vld [vmem:[%s0] sm:$0xff]
    %v43 = vld [vmem:[%s0 + $0x8] sm:$0xff]
    %v44 = vpack.c.bf16 %v43, %v42
    %45 = vst.msk [vmem:[#allocation3] sm:$0xff] %vm39, %v44
  $region41: #{featured_transfer_forward.8} parent=0 // pred_fallthru
    _
  %v46 = vld [vmem:[%s1] sm:$0xff]
  %v47 = vld [vmem:[%s1 + $0x8] sm:$0xff]
  %v48 = vld [vmem:[%s1 + $0x10] sm:$0xff]
  %v49 = vlaneseq
  %v50 = vand.u32 %v49, 127
  %51 = vset.pattern.permute.xlu0 0
  %52 = vperm.xlu0 %51, %v46
  %v53 = vpop.permute.xlu0 %52
  %54 = vset.pattern.permute.xlu0 0
  %55 = vperm.xlu0 %54, %v47
  %v56 = vpop.permute.xlu0 %55
  %57 = vset.pattern.permute.xlu0 0
  %58 = vperm.xlu0 %57, %v48
  %v59 = vpop.permute.xlu0 %58
  %vm60 = vcmp.eq.s32.totalorder %v50, %v53
  %vm61 = vcmp.eq.s32.totalorder %v50, %v56
  %vm62 = vcmp.eq.s32.totalorder %v50, %v59
  %v63 = vsel %vm60, 1, 0
  %v64 = vsel %vm61, 1, 0
  %v65 = vsel %vm62, 1, 0
  %v66 = vcvt.s32.f32 %v63
  %v67 = vcvt.s32.f32 %v64
  %v68 = vcvt.s32.f32 %v65
  %v69 = vpack.c.bf16 %v67, %v66
  %v70 = vpack.c.bf16 %v68, %v68
  %v71 = vld [vmem:[#allocation3] sm:$0xff]
  %v72 = vld [vmem:[%s3] sm:$0xff]
  %v73 = vld [vmem:[%s3 + $0x8] sm:$0xff]
  %v74 = vld [vmem:[%s3 + $0x10] sm:$0xff]
  %vm75 = vcmask 130048
  %v77 = vsel %vm75, %v69, 0
  %v80 = vsel %vm75, %v70, 0
  %82 = vmatprep.subr.bf16.mxu0 0
  %83 = vmatpush1.bf16.msra.mxu0 %v71
  %84 = vmatprep.subr.bf16.mxu0 0
  %85 = vmatpush1.bf16.msra.mxu0 0
  %86 = vmatprep.subr.bf16.mxu0 0
  %87 = vmatpush1.bf16.msra.mxu0 0
  %88 = vmatprep.subr.bf16.mxu0 0
  %89 = vmatpush1.bf16.msra.mxu0 0
  %90 = vmatprep.subr.bf16.mxu0 0
  %91 = vmatpush1.bf16.msra.mxu0 0
  %92 = vmatprep.subr.bf16.mxu0 0
  %93 = vmatpush1.bf16.msra.mxu0 0
  %94 = vmatprep.subr.bf16.mxu0 0
  %95 = vmatpush1.bf16.msra.mxu0 0
  %96 = vmatprep.subr.bf16.mxu0 0
  %97 = vmatpush1.bf16.msra.mxu0 0
  %98 = vmatprep.subr.bf16.mxu0 0
  %99 = vmatpush1.bf16.msra.mxu0 0
  %100 = vmatprep.subr.bf16.mxu0 0
  %101 = vmatpush1.bf16.msra.mxu0 0
  %102 = vmatprep.subr.bf16.mxu0 0
  %103 = vmatpush1.bf16.msra.mxu0 0
  %104 = vmatprep.subr.bf16.mxu0 0
  %105 = vmatpush1.bf16.msra.mxu0 0
  %106 = vmatprep.subr.bf16.mxu0 0
  %107 = vmatpush1.bf16.msra.mxu0 0
  %108 = vmatprep.subr.bf16.mxu0 0
  %109 = vmatpush1.bf16.msra.mxu0 0
  %110 = vmatprep.subr.bf16.mxu0 0
  %111 = vmatpush1.bf16.msra.mxu0 0
  %112 = vmatprep.subr.bf16.mxu0 0
  %113 = vmatpush1.bf16.msra.mxu0 0
  %114 = vmatprep.mubr.bf16.mxu0 0
  %115 = vmatmul.mubr.bf16.gmra.mrb[0].mxu0 %v77
  %v116 = vpop.f32.mrb[0].mxu0
  %v117 = vadd.f32 %v72, %v116
  %v118 = vpop.f32.mrb[0].mxu0
  %v119 = vpop.f32.mrb[0].mxu0
  %v120 = vadd.f32 %v73, %v119
  %v121 = vpop.f32.mrb[0].mxu0
  %122 = vmatprep.mubr.bf16.mxu0 0
  %123 = vmatmul.mubr.bf16.gmra.mrb[0].mxu0 %v80
  %v124 = vpop.f32.mrb[0].mxu0
  %v125 = vadd.f32 %v74, %v124
  %v126 = vpop.f32.mrb[0].mxu0
  %v127 = vpop.f32.mrb[0].mxu0
  %v128 = vpop.f32.mrb[0].mxu0
  %129 = vdwg.mxu0
  %v130 = vmax.f32 %v117, 0.0
  %v131 = vmax.f32 %v120, 0.0
  %v132 = vmax.f32 %v125, 0.0
  %v133 = vld [vmem:[%s4] sm:$0xff]
  %v134 = vld [vmem:[%s4 + $0x8] sm:$0xff]
  %v135 = vld [vmem:[%s4 + $0x10] sm:$0xff]
  %137 = vset.pattern.permute.xlu0 0
  %138 = vperm.xlu0 %137, %v133
  %v139 = vpop.permute.xlu0 %138
  %142 = vset.pattern.permute.xlu0 0
  %143 = vperm.xlu0 %142, %v134
  %v144 = vpop.permute.xlu0 %143
  %147 = vset.pattern.permute.xlu0 0
  %148 = vperm.xlu0 %147, %v135
  %v149 = vpop.permute.xlu0 %148
  %v151 = vmul.f32 %v130, %v139
  %v152 = vmul.f32 %v131, %v144
  %v153 = vmul.f32 %v132, %v149
  %v154 = vld [vmem:[%s2] sm:$0x1]
  %v155 = vlaneseq
  %v156 = vshrl.u32 %v155, 7
  %v157 = vadd.s32 %v156, 8
  %v158 = vlaneseq
  %v159 = vshrl.u32 %v158, 7
  %v160 = vsub.s32 0, %v159
  %v161 = vrot.slane %v154, %v160
  %vm162 = vcmp.eq.s32.totalorder %v156, %v161
  %vm163 = vcmp.eq.s32.totalorder %v157, %v161
  %v164 = vsel %vm162, 1, 0
  %v165 = vsel %vm163, 1, 0
  %v166 = vcvt.s32.f32 %v164
  %v167 = vcvt.s32.f32 %v165
  %v168 = vpack.c.bf16 %v167, %v166
  %v169 = vld [vmem:[#allocation2] sm:$0xff]
  %v170 = vld [vmem:[#allocation2 + $0x8] sm:$0xff]
  %v171 = vpack.c.bf16 %v152, %v151
  %v172 = vpack.c.bf16 %v153, %v153
  %vm173 = vcmask 195584
  %v175 = vsel %vm173, %v168, 0
  %vm177 = vcmask 1043456
  %v179 = vsel %vm177, %v172, 0
  %181 = vmatprep.subr.bf16.mxu0 0
  %182 = vmatpush1.bf16.msra.mxu0 %v171
  %183 = vmatprep.subr.bf16.mxu0 0
  %184 = vmatpush1.bf16.msra.mxu0 %v179
  %185 = vmatprep.subr.bf16.mxu0 0
  %186 = vmatpush1.bf16.msra.mxu0 0
  %187 = vmatprep.subr.bf16.mxu0 0
  %188 = vmatpush1.bf16.msra.mxu0 0
  %189 = vmatprep.subr.bf16.mxu0 0
  %190 = vmatpush1.bf16.msra.mxu0 0
  %191 = vmatprep.subr.bf16.mxu0 0
  %192 = vmatpush1.bf16.msra.mxu0 0
  %193 = vmatprep.subr.bf16.mxu0 0
  %194 = vmatpush1.bf16.msra.mxu0 0
  %195 = vmatprep.subr.bf16.mxu0 0
  %196 = vmatpush1.bf16.msra.mxu0 0
  %197 = vmatprep.subr.bf16.mxu0 0
  %198 = vmatpush1.bf16.msra.mxu0 0
  %199 = vmatprep.subr.bf16.mxu0 0
  %200 = vmatpush1.bf16.msra.mxu0 0
  %201 = vmatprep.subr.bf16.mxu0 0
  %202 = vmatpush1.bf16.msra.mxu0 0
  %203 = vmatprep.subr.bf16.mxu0 0
  %204 = vmatpush1.bf16.msra.mxu0 0
  %205 = vmatprep.subr.bf16.mxu0 0
  %206 = vmatpush1.bf16.msra.mxu0 0
  %207 = vmatprep.subr.bf16.mxu0 0
  %208 = vmatpush1.bf16.msra.mxu0 0
  %209 = vmatprep.subr.bf16.mxu0 0
  %210 = vmatpush1.bf16.msra.mxu0 0
  %211 = vmatprep.subr.bf16.mxu0 0
  %212 = vmatpush1.bf16.msra.mxu0 0
  %213 = vmatprep.mubr.bf16.mxu0 0
  %214 = vmatmul.mubr.bf16.gmra.mrb[0].mxu0 %v175
  %v215 = vpop.f32.mrb[0].mxu0
  %v216 = vadd.f32 0.0, %v215
  %v217 = vpop.f32.mrb[0].mxu0
  %v218 = vpop.f32.mrb[0].mxu0
  %v219 = vadd.f32 0.0, %v218
  %v220 = vpop.f32.mrb[0].mxu0
  %221 = vdwg.mxu0
  %v222 = vadd.f32 %v169, %v216
  %v223 = vadd.f32 %v170, %v219
  %vm224 = vcmask 261120
  %225 = vst.msk [vmem:[#allocation2] sm:$0xff] %vm224, %v222
  %226 = vst.msk [vmem:[#allocation2 + $0x8] sm:$0xff] %vm224, %v223
  // Predicated region
  $region42: #{featured_transfer_forward.8} parent=0 // pred_check
    %p227 = pneg %p33
  $region43: #{featured_transfer_forward.8} parent=0 // pred_check_branch
    %229 = sbr.rel (%p227) target = $region45
  $region44: #{featured_transfer_forward.8} parent=0 // pred_region
    %v230 = vld [vmem:[#allocation2] sm:$0xff]
    %v231 = vld [vmem:[#allocation2 + $0x8] sm:$0xff]
    %v232 = vpack.c.bf16 %v231, %v230
    %v233 = vld [vmem:[%s5] sm:$0xf]
    %v234 = vld [vmem:[%s5 + $0x4] sm:$0xf]
    %v235 = vld [vmem:[%s5 + $0x8] sm:$0xf]
    %v236 = vld [vmem:[%s5 + $0xc] sm:$0xf]
    %v237 = vld [vmem:[%s6] sm:$0x1]
    %v239 = vlaneseq
    %v240 = vshrl.u32 %v239, 7
    %v241 = vsub.s32 0, %v240
    %v242 = vrot.slane %v237, %v241
    %v248 = vunpack.c.l.b16 %v233
    %v249 = vunpack.c.l.b16 %v234
    %v250 = vunpack.c.l.b16 %v235
    %v251 = vunpack.c.l.b16 %v236
    %v252 = vpack.c.b16 %v249, %v248
    %v253 = vpack.c.b16 %v251, %v250
    %v257 = vsel %vm224, %v232, 0
    %259 = vmatprep.subr.bf16.mxu0 0
    %260 = vmatpush1.bf16.msra.mxu0 %v252
    %261 = vmatprep.subr.bf16.mxu0 0
    %262 = vmatpush1.bf16.msra.mxu0 %v253
    %263 = vmatprep.subr.bf16.mxu0 0
    %264 = vmatpush1.bf16.msra.mxu0 0
    %265 = vmatprep.subr.bf16.mxu0 0
    %266 = vmatpush1.bf16.msra.mxu0 0
    %267 = vmatprep.subr.bf16.mxu0 0
    %268 = vmatpush1.bf16.msra.mxu0 0
    %269 = vmatprep.subr.bf16.mxu0 0
    %270 = vmatpush1.bf16.msra.mxu0 0
    %271 = vmatprep.subr.bf16.mxu0 0
    %272 = vmatpush1.bf16.msra.mxu0 0
    %273 = vmatprep.subr.bf16.mxu0 0
    %274 = vmatpush1.bf16.msra.mxu0 0
    %275 = vmatprep.subr.bf16.mxu0 0
    %276 = vmatpush1.bf16.msra.mxu0 0
    %277 = vmatprep.subr.bf16.mxu0 0
    %278 = vmatpush1.bf16.msra.mxu0 0
    %279 = vmatprep.subr.bf16.mxu0 0
    %280 = vmatpush1.bf16.msra.mxu0 0
    %281 = vmatprep.subr.bf16.mxu0 0
    %282 = vmatpush1.bf16.msra.mxu0 0
    %283 = vmatprep.subr.bf16.mxu0 0
    %284 = vmatpush1.bf16.msra.mxu0 0
    %285 = vmatprep.subr.bf16.mxu0 0
    %286 = vmatpush1.bf16.msra.mxu0 0
    %287 = vmatprep.subr.bf16.mxu0 0
    %288 = vmatpush1.bf16.msra.mxu0 0
    %289 = vmatprep.subr.bf16.mxu0 0
    %290 = vmatpush1.bf16.msra.mxu0 0
    %291 = vmatprep.mubr.bf16.mxu0 0
    %292 = vmatmul.mubr.bf16.gmra.mrb[0].mxu0 %v257
    %v293 = vpop.f32.mrb[0].mxu0
    %v294 = vadd.f32 %v242, %v293
    %v295 = vpop.f32.mrb[0].mxu0
    %v296 = vpop.f32.mrb[0].mxu0
    %v297 = vadd.f32 %v242, %v296
    %v298 = vpop.f32.mrb[0].mxu0
    %299 = vdwg.mxu0
    %v300 = vmax.f32 %v294, 0.0
    %v301 = vmax.f32 %v297, 0.0
    %v302 = vpack.c.bf16 %v301, %v300
    %v303 = vld [vmem:[%s7] sm:$0xf]
    %v304 = vld [vmem:[%s7 + $0x4] sm:$0xf]
    %v305 = vld [vmem:[%s7 + $0x8] sm:$0xf]
    %v306 = vld [vmem:[%s7 + $0xc] sm:$0xf]
    %v307 = vld [vmem:[%s7 + $0x10] sm:$0xf]
    %v308 = vld [vmem:[%s7 + $0x14] sm:$0xf]
    %v309 = vld [vmem:[%s7 + $0x18] sm:$0xf]
    %v310 = vld [vmem:[%s7 + $0x1c] sm:$0xf]
    %v311 = vld [vmem:[%s8] sm:$0x1]
    %v313 = vlaneseq
    %v314 = vshrl.u32 %v313, 7
    %v315 = vsub.s32 0, %v314
    %v316 = vrot.slane %v311, %v315
    %v326 = vunpack.c.l.b16 %v303
    %v327 = vunpack.c.l.b16 %v304
    %v328 = vunpack.c.l.b16 %v305
    %v329 = vunpack.c.l.b16 %v306
    %v330 = vunpack.c.l.b16 %v307
    %v331 = vunpack.c.l.b16 %v308
    %v332 = vunpack.c.l.b16 %v309
    %v333 = vunpack.c.l.b16 %v310
    %v334 = vpack.c.b16 %v327, %v326
    %v335 = vpack.c.b16 %v329, %v328
    %v336 = vpack.c.b16 %v331, %v330
    %v337 = vpack.c.b16 %v333, %v332
    %vm342 = vcmask 523264
    %v344 = vsel %vm342, %v302, 0
    %346 = vmatprep.subr.bf16.mxu0 0
    %347 = vmatpush1.bf16.msra.mxu0 %v334
    %348 = vmatprep.subr.bf16.mxu0 0
    %349 = vmatpush1.bf16.msra.mxu0 %v335
    %350 = vmatprep.subr.bf16.mxu0 0
    %351 = vmatpush1.bf16.msra.mxu0 %v336
    %352 = vmatprep.subr.bf16.mxu0 0
    %353 = vmatpush1.bf16.msra.mxu0 %v337
    %354 = vmatprep.subr.bf16.mxu0 0
    %355 = vmatpush1.bf16.msra.mxu0 0
    %356 = vmatprep.subr.bf16.mxu0 0
    %357 = vmatpush1.bf16.msra.mxu0 0
    %358 = vmatprep.subr.bf16.mxu0 0
    %359 = vmatpush1.bf16.msra.mxu0 0
    %360 = vmatprep.subr.bf16.mxu0 0
    %361 = vmatpush1.bf16.msra.mxu0 0
    %362 = vmatprep.subr.bf16.mxu0 0
    %363 = vmatpush1.bf16.msra.mxu0 0
    %364 = vmatprep.subr.bf16.mxu0 0
    %365 = vmatpush1.bf16.msra.mxu0 0
    %366 = vmatprep.subr.bf16.mxu0 0
    %367 = vmatpush1.bf16.msra.mxu0 0
    %368 = vmatprep.subr.bf16.mxu0 0
    %369 = vmatpush1.bf16.msra.mxu0 0
    %370 = vmatprep.subr.bf16.mxu0 0
    %371 = vmatpush1.bf16.msra.mxu0 0
    %372 = vmatprep.subr.bf16.mxu0 0
    %373 = vmatpush1.bf16.msra.mxu0 0
    %374 = vmatprep.subr.bf16.mxu0 0
    %375 = vmatpush1.bf16.msra.mxu0 0
    %376 = vmatprep.subr.bf16.mxu0 0
    %377 = vmatpush1.bf16.msra.mxu0 0
    %378 = vmatprep.mubr.bf16.mxu0 0
    %379 = vmatmul.mubr.bf16.gmra.mrb[0].mxu0 %v344
    %v380 = vpop.f32.mrb[0].mxu0
    %v381 = vadd.f32 %v316, %v380
    %v382 = vpop.f32.mrb[0].mxu0
    %v383 = vpop.f32.mrb[0].mxu0
    %v384 = vadd.f32 %v316, %v383
    %v385 = vpop.f32.mrb[0].mxu0
    %386 = vdwg.mxu0
    %387 = vst.msk [vmem:[%s9] sm:$0xff] %vm224, %v381
    %388 = vst.msk [vmem:[%s9 + $0x8] sm:$0xff] %vm224, %v384
  $region45: #{featured_transfer_forward.8} parent=0 // pred_fallthru
    _
  // Predicated region
  $region46: #{featured_transfer_forward.8} parent=0 // pred_check
    _
  $region47: #{featured_transfer_forward.8} parent=0 // pred_check_branch
    %390 = sbr.rel (0) target = $region49
  $region48: #{featured_transfer_forward.8} parent=0 // pred_region
    _
  $region49: #{featured_transfer_forward.8} parent=0 // pred_fallthru
    _
  // Predicated region
  $region50: #{featured_transfer_forward.8} parent=0 // pred_check
    _
  $region51: #{featured_transfer_forward.8} parent=0 // pred_check_branch
    %392 = sbr.rel (0) target = $region53
  $region52: #{featured_transfer_forward.8} parent=0 // pred_region
    _
  $region53: #{featured_transfer_forward.8} parent=0 // pred_fallthru
    _

// kernel: featured_transfer_forward.9
$region0: #{featured_transfer_forward.9}
  #allocation0 [shape = 'u32[]', space=smem, size = 0x4, offset = 0x4, fixed_abs, tag = 'smem constant byte address 0x4 - core index']
  #allocation1 [shape = 'u32[144,128]{1,0:T(1,128)}', space=vmem, size = 0x12000, scoped, tag = 'internal scratch']
  %s0 = inlined_call_operand.vmem [shape: f32[16,32], index: 0, kind: input, shape index: {}]
  %s1 = inlined_call_operand.vmem [shape: s32[1,16], index: 1, kind: input, shape index: {}]
  %s2 = inlined_call_operand.vmem [shape: bf16[32,32], index: 2, kind: input, shape index: {}]
  %s3 = inlined_call_operand.vmem [shape: f32[1,32], index: 3, kind: input, shape index: {}]
  %s4 = inlined_call_operand.vmem [shape: bf16[32,32], index: 4, kind: input, shape index: {}]
  %s5 = inlined_call_operand.vmem [shape: f32[1,32], index: 5, kind: input, shape index: {}]
  %s6 = inlined_call_operand.hbm [shape: f32[2,32], index: 6, kind: output, shape index: {}]
  %s7 = sld [smem:[#allocation0]]
  $region34: #{featured_transfer_forward.9} parent=0
    _
  %s9 = ssub.s32 1, %s7
  %s10 = scalar_select 0, %s9, %s7
  $region1: #{featured_transfer_forward.9} parent=0
    #allocation2 [shape = 'u8[1024]{0}', space=vmem, size = 0x400, scoped, tag = 'output window, operand 0, single buffered']
    #allocation3 [shape = 's32[1]{0}', space=sflag, size = 0x4, scoped, tag = 'scoped memory for featured_transfer_forward.9']
    %11 = vsyncpa [#allocation3], 0
    // Predicated region
    $region2: #{featured_transfer_forward.9} parent=1 // pred_check
      _
    $region3: #{featured_transfer_forward.9} parent=1 // pred_check_branch
      %13 = sbr.rel (0) target = $region5
    $region4: #{featured_transfer_forward.9} parent=1 // pred_region
      _
    $region5: #{featured_transfer_forward.9} parent=1 // pred_fallthru
      _
    // Predicated region
    $region6: #{featured_transfer_forward.9} parent=1 // pred_check
      _
    $region7: #{featured_transfer_forward.9} parent=1 // pred_check_branch
      %15 = sbr.rel (0) target = $region9
    $region8: #{featured_transfer_forward.9} parent=1 // pred_region
      _
    $region9: #{featured_transfer_forward.9} parent=1 // pred_fallthru
      _
    // Predicated region
    $region10: #{featured_transfer_forward.9} parent=1 // pred_check
      _
    $region11: #{featured_transfer_forward.9} parent=1 // pred_check_branch
      %17 = sbr.rel (0) target = $region13
    $region12: #{featured_transfer_forward.9} parent=1 // pred_region
      _
    $region13: #{featured_transfer_forward.9} parent=1 // pred_fallthru
      _
    // Predicated region
    $region14: #{featured_transfer_forward.9} parent=1 // pred_check
      _
    $region15: #{featured_transfer_forward.9} parent=1 // pred_check_branch
      %19 = sbr.rel (0) target = $region17
    $region16: #{featured_transfer_forward.9} parent=1 // pred_region
      _
    $region17: #{featured_transfer_forward.9} parent=1 // pred_fallthru
      _
    // Predicated region
    $region18: #{featured_transfer_forward.9} parent=1 // pred_check
      _
    $region19: #{featured_transfer_forward.9} parent=1 // pred_check_branch
      %21 = sbr.rel (0) target = $region21
    $region20: #{featured_transfer_forward.9} parent=1 // pred_region
      _
    $region21: #{featured_transfer_forward.9} parent=1 // pred_fallthru
      _
    // Predicated region
    $region22: #{featured_transfer_forward.9} parent=1 // pred_check
      _
    $region23: #{featured_transfer_forward.9} parent=1 // pred_check_branch
      %23 = sbr.rel (0) target = $region25
    $region24: #{featured_transfer_forward.9} parent=1 // pred_region
      _
    $region25: #{featured_transfer_forward.9} parent=1 // pred_fallthru
      _
    %v25 = vld [vmem:[%s1] sm:$0x1]
    %v26 = vlaneseq
    %v27 = vshrl.u32 %v26, 7
    %v28 = vlaneseq
    %v29 = vshrl.u32 %v28, 7
    %v30 = vsub.s32 0, %v29
    %v31 = vrot.slane %v25, %v30
    %vm32 = vcmp.eq.s32.totalorder %v27, %v31
    %v33 = vsel %vm32, 1, 0
    %v34 = vcvt.s32.f32 %v33
    %v35 = vpack.c.bf16 %v34, %v34
    %v36 = vld [vmem:[%s0] sm:$0xff]
    %v37 = vld [vmem:[%s0 + $0x8] sm:$0xff]
    %v38 = vpack.c.bf16 %v37, %v36
    %vm39 = vcmask 130048
    %v41 = vsel %vm39, %v35, 0
    %43 = vmatprep.subr.bf16.mxu0 0
    %44 = vmatpush1.bf16.msra.mxu0 %v38
    %45 = vmatprep.subr.bf16.mxu0 0
    %46 = vmatpush1.bf16.msra.mxu0 0
    %47 = vmatprep.subr.bf16.mxu0 0
    %48 = vmatpush1.bf16.msra.mxu0 0
    %49 = vmatprep.subr.bf16.mxu0 0
    %50 = vmatpush1.bf16.msra.mxu0 0
    %51 = vmatprep.subr.bf16.mxu0 0
    %52 = vmatpush1.bf16.msra.mxu0 0
    %53 = vmatprep.subr.bf16.mxu0 0
    %54 = vmatpush1.bf16.msra.mxu0 0
    %55 = vmatprep.subr.bf16.mxu0 0
    %56 = vmatpush1.bf16.msra.mxu0 0
    %57 = vmatprep.subr.bf16.mxu0 0
    %58 = vmatpush1.bf16.msra.mxu0 0
    %59 = vmatprep.subr.bf16.mxu0 0
    %60 = vmatpush1.bf16.msra.mxu0 0
    %61 = vmatprep.subr.bf16.mxu0 0
    %62 = vmatpush1.bf16.msra.mxu0 0
    %63 = vmatprep.subr.bf16.mxu0 0
    %64 = vmatpush1.bf16.msra.mxu0 0
    %65 = vmatprep.subr.bf16.mxu0 0
    %66 = vmatpush1.bf16.msra.mxu0 0
    %67 = vmatprep.subr.bf16.mxu0 0
    %68 = vmatpush1.bf16.msra.mxu0 0
    %69 = vmatprep.subr.bf16.mxu0 0
    %70 = vmatpush1.bf16.msra.mxu0 0
    %71 = vmatprep.subr.bf16.mxu0 0
    %72 = vmatpush1.bf16.msra.mxu0 0
    %73 = vmatprep.subr.bf16.mxu0 0
    %74 = vmatpush1.bf16.msra.mxu0 0
    %75 = vmatprep.mubr.bf16.mxu0 0
    %76 = vmatmul.mubr.bf16.gmra.mrb[0].mxu0 %v41
    %v77 = vpop.f32.mrb[0].mxu0
    %v78 = vadd.f32 0.0, %v77
    %v79 = vpop.f32.mrb[0].mxu0
    %v80 = vpop.f32.mrb[0].mxu0
    %v81 = vpop.f32.mrb[0].mxu0
    %82 = vdwg.mxu0
    %v83 = vmul.f32 %v78, %v78
    %vm84 = vcmask 254976
    %v85 = vsel %vm84, %v83, 0.0
    %86 = vadd.xlane.f32.xlu0 %v85
    %v87 = vpop.xlane.xlu0 %86
    %v88 = vadd.f32 %v87, 1e-24
    %v89 = vrsqrt.pop %v88
    %v90 = vmul.f32 %v78, %v89
    %v91 = vpack.c.bf16 %v90, %v90
    %v92 = vld [vmem:[%s2] sm:$0xf]
    %v93 = vld [vmem:[%s2 + $0x4] sm:$0xf]
    %v94 = vld [vmem:[%s2 + $0x8] sm:$0xf]
    %v95 = vld [vmem:[%s2 + $0xc] sm:$0xf]
    %v96 = vld [vmem:[%s3] sm:$0x1]
    %v98 = vlaneseq
    %v99 = vshrl.u32 %v98, 7
    %v100 = vsub.s32 0, %v99
    %v101 = vrot.slane %v96, %v100
    %v107 = vunpack.c.l.b16 %v92
    %v108 = vunpack.c.l.b16 %v93
    %v109 = vunpack.c.l.b16 %v94
    %v110 = vunpack.c.l.b16 %v95
    %v111 = vpack.c.b16 %v108, %v107
    %v112 = vpack.c.b16 %v110, %v109
    %vm115 = vcmask 261120
    %v117 = vsel %vm115, %v91, 0
    %119 = vmatprep.subr.bf16.mxu0 0
    %120 = vmatpush1.bf16.msra.mxu0 %v111
    %121 = vmatprep.subr.bf16.mxu0 0
    %122 = vmatpush1.bf16.msra.mxu0 %v112
    %123 = vmatprep.subr.bf16.mxu0 0
    %124 = vmatpush1.bf16.msra.mxu0 0
    %125 = vmatprep.subr.bf16.mxu0 0
    %126 = vmatpush1.bf16.msra.mxu0 0
    %127 = vmatprep.subr.bf16.mxu0 0
    %128 = vmatpush1.bf16.msra.mxu0 0
    %129 = vmatprep.subr.bf16.mxu0 0
    %130 = vmatpush1.bf16.msra.mxu0 0
    %131 = vmatprep.subr.bf16.mxu0 0
    %132 = vmatpush1.bf16.msra.mxu0 0
    %133 = vmatprep.subr.bf16.mxu0 0
    %134 = vmatpush1.bf16.msra.mxu0 0
    %135 = vmatprep.subr.bf16.mxu0 0
    %136 = vmatpush1.bf16.msra.mxu0 0
    %137 = vmatprep.subr.bf16.mxu0 0
    %138 = vmatpush1.bf16.msra.mxu0 0
    %139 = vmatprep.subr.bf16.mxu0 0
    %140 = vmatpush1.bf16.msra.mxu0 0
    %141 = vmatprep.subr.bf16.mxu0 0
    %142 = vmatpush1.bf16.msra.mxu0 0
    %143 = vmatprep.subr.bf16.mxu0 0
    %144 = vmatpush1.bf16.msra.mxu0 0
    %145 = vmatprep.subr.bf16.mxu0 0
    %146 = vmatpush1.bf16.msra.mxu0 0
    %147 = vmatprep.subr.bf16.mxu0 0
    %148 = vmatpush1.bf16.msra.mxu0 0
    %149 = vmatprep.subr.bf16.mxu0 0
    %150 = vmatpush1.bf16.msra.mxu0 0
    %151 = vmatprep.mubr.bf16.mxu0 0
    %152 = vmatmul.mubr.bf16.gmra.mrb[0].mxu0 %v117
    %v153 = vpop.f32.mrb[0].mxu0
    %v154 = vadd.f32 %v101, %v153
    %v155 = vpop.f32.mrb[0].mxu0
    %v156 = vpop.f32.mrb[0].mxu0
    %v157 = vpop.f32.mrb[0].mxu0
    %158 = vdwg.mxu0
    %v159 = vmax.f32 %v154, 0.0
    %v160 = vpack.c.bf16 %v159, %v159
    %v161 = vld [vmem:[%s4] sm:$0xf]
    %v162 = vld [vmem:[%s4 + $0x4] sm:$0xf]
    %v163 = vld [vmem:[%s4 + $0x8] sm:$0xf]
    %v164 = vld [vmem:[%s4 + $0xc] sm:$0xf]
    %v165 = vld [vmem:[%s5] sm:$0x1]
    %v167 = vlaneseq
    %v168 = vshrl.u32 %v167, 7
    %v169 = vsub.s32 0, %v168
    %v170 = vrot.slane %v165, %v169
    %v176 = vunpack.c.l.b16 %v161
    %v177 = vunpack.c.l.b16 %v162
    %v178 = vunpack.c.l.b16 %v163
    %v179 = vunpack.c.l.b16 %v164
    %v180 = vpack.c.b16 %v177, %v176
    %v181 = vpack.c.b16 %v179, %v178
    %v185 = vsel %vm115, %v160, 0
    %187 = vmatprep.subr.bf16.mxu0 0
    %188 = vmatpush1.bf16.msra.mxu0 %v180
    %189 = vmatprep.subr.bf16.mxu0 0
    %190 = vmatpush1.bf16.msra.mxu0 %v181
    %191 = vmatprep.subr.bf16.mxu0 0
    %192 = vmatpush1.bf16.msra.mxu0 0
    %193 = vmatprep.subr.bf16.mxu0 0
    %194 = vmatpush1.bf16.msra.mxu0 0
    %195 = vmatprep.subr.bf16.mxu0 0
    %196 = vmatpush1.bf16.msra.mxu0 0
    %197 = vmatprep.subr.bf16.mxu0 0
    %198 = vmatpush1.bf16.msra.mxu0 0
    %199 = vmatprep.subr.bf16.mxu0 0
    %200 = vmatpush1.bf16.msra.mxu0 0
    %201 = vmatprep.subr.bf16.mxu0 0
    %202 = vmatpush1.bf16.msra.mxu0 0
    %203 = vmatprep.subr.bf16.mxu0 0
    %204 = vmatpush1.bf16.msra.mxu0 0
    %205 = vmatprep.subr.bf16.mxu0 0
    %206 = vmatpush1.bf16.msra.mxu0 0
    %207 = vmatprep.subr.bf16.mxu0 0
    %208 = vmatpush1.bf16.msra.mxu0 0
    %209 = vmatprep.subr.bf16.mxu0 0
    %210 = vmatpush1.bf16.msra.mxu0 0
    %211 = vmatprep.subr.bf16.mxu0 0
    %212 = vmatpush1.bf16.msra.mxu0 0
    %213 = vmatprep.subr.bf16.mxu0 0
    %214 = vmatpush1.bf16.msra.mxu0 0
    %215 = vmatprep.subr.bf16.mxu0 0
    %216 = vmatpush1.bf16.msra.mxu0 0
    %217 = vmatprep.subr.bf16.mxu0 0
    %218 = vmatpush1.bf16.msra.mxu0 0
    %219 = vmatprep.mubr.bf16.mxu0 0
    %220 = vmatmul.mubr.bf16.gmra.mrb[0].mxu0 %v185
    %v221 = vpop.f32.mrb[0].mxu0
    %v222 = vadd.f32 %v170, %v221
    %v223 = vpop.f32.mrb[0].mxu0
    %v224 = vpop.f32.mrb[0].mxu0
    %v225 = vpop.f32.mrb[0].mxu0
    %226 = vdwg.mxu0
    %227 = vst.msk [vmem:[#allocation2] sm:$0x3] %vm84, %v222
    // Predicated region
    $region26: #{featured_transfer_forward.9} parent=1 // pred_check
      _
    $region27: #{featured_transfer_forward.9} parent=1 // pred_check_branch
      %229 = sbr.rel (0) target = $region29
    $region28: #{featured_transfer_forward.9} parent=1 // pred_region
      %s231 = ssub.s32 32, 32
      %232 = vsyncadd [#allocation3], %s231
      %s234 = sshll.u32 [#allocation2], 4
      %s235 = int_to_ptr.vmem [resolvable:$true] %s234
      %237 = dma.vmem_to_hbm [thread:$0]  %s235, 32, %s6, [#allocation3]
    $region29: #{featured_transfer_forward.9} parent=1 // pred_fallthru
      _
    // Predicated region
    $region30: #{featured_transfer_forward.9} parent=1 // pred_check
      _
    $region31: #{featured_transfer_forward.9} parent=1 // pred_check_branch
      %239 = sbr.rel (0) target = $region33
    $region32: #{featured_transfer_forward.9} parent=1 // pred_region
      %240 = dma.done [#allocation3], 32
    $region33: #{featured_transfer_forward.9} parent=1 // pred_fallthru
      _
    %241 = vsyncpa [#allocation3], 1

// kernel: featured_transfer_forward.7
$region0: #{featured_transfer_forward.7}
  #allocation0 [shape = 'u32[]', space=smem, size = 0x4, offset = 0x4, fixed_abs, tag = 'smem constant byte address 0x4 - core index']
  #allocation1 [shape = 'u32[144,128]{1,0:T(1,128)}', space=vmem, size = 0x12000, scoped, tag = 'internal scratch']
  #allocation2 [shape = 'f32[16,32]{1,0:T(8,128)}', space=vmem, size = 0x2000, scoped, tag = 'scratch operand']
  #allocation3 [shape = 'bf16[16,32]{1,0:T(16,128)(2,1)}', space=vmem, size = 0x1000, scoped, tag = 'scratch operand']
  %s0 = inlined_call_operand.vmem [shape: f32[16,32], index: 0, kind: input, shape index: {}]
  %s1 = inlined_call_operand.vmem [shape: s32[24,1], index: 1, kind: input, shape index: {}]
  %s2 = inlined_call_operand.vmem [shape: s32[1,24], index: 2, kind: input, shape index: {}]
  %s3 = inlined_call_operand.vmem [shape: f32[24,32], index: 3, kind: input, shape index: {}]
  %s4 = inlined_call_operand.vmem [shape: f32[24,1], index: 4, kind: input, shape index: {}]
  %s5 = inlined_call_operand.vmem [shape: bf16[32,64], index: 5, kind: input, shape index: {}]
  %s6 = inlined_call_operand.vmem [shape: f32[1,64], index: 6, kind: input, shape index: {}]
  %s7 = inlined_call_operand.vmem [shape: bf16[64,32], index: 7, kind: input, shape index: {}]
  %s8 = inlined_call_operand.vmem [shape: f32[1,32], index: 8, kind: input, shape index: {}]
  %s9 = inlined_call_operand.vmem [shape: f32[16,32], index: 9, kind: output, shape index: {}]
  %s10 = sld [smem:[#allocation0]]
  $region54: #{featured_transfer_forward.7} parent=0
    _
  %s12 = ssub.s32 1, %s10
  %s13 = scalar_select 0, %s12, %s10
  // Predicated region
  $region2: #{featured_transfer_forward.7} parent=0 // pred_check
    _
  $region3: #{featured_transfer_forward.7} parent=0 // pred_check_branch
    %15 = sbr.rel (0) target = $region5
  $region4: #{featured_transfer_forward.7} parent=0 // pred_region
    _
  $region5: #{featured_transfer_forward.7} parent=0 // pred_fallthru
    _
  // Predicated region
  $region6: #{featured_transfer_forward.7} parent=0 // pred_check
    _
  $region7: #{featured_transfer_forward.7} parent=0 // pred_check_branch
    %17 = sbr.rel (0) target = $region9
  $region8: #{featured_transfer_forward.7} parent=0 // pred_region
    _
  $region9: #{featured_transfer_forward.7} parent=0 // pred_fallthru
    _
  // Predicated region
  $region10: #{featured_transfer_forward.7} parent=0 // pred_check
    _
  $region11: #{featured_transfer_forward.7} parent=0 // pred_check_branch
    %19 = sbr.rel (0) target = $region13
  $region12: #{featured_transfer_forward.7} parent=0 // pred_region
    _
  $region13: #{featured_transfer_forward.7} parent=0 // pred_fallthru
    _
  // Predicated region
  $region14: #{featured_transfer_forward.7} parent=0 // pred_check
    _
  $region15: #{featured_transfer_forward.7} parent=0 // pred_check_branch
    %21 = sbr.rel (0) target = $region17
  $region16: #{featured_transfer_forward.7} parent=0 // pred_region
    _
  $region17: #{featured_transfer_forward.7} parent=0 // pred_fallthru
    _
  // Predicated region
  $region18: #{featured_transfer_forward.7} parent=0 // pred_check
    _
  $region19: #{featured_transfer_forward.7} parent=0 // pred_check_branch
    %23 = sbr.rel (0) target = $region21
  $region20: #{featured_transfer_forward.7} parent=0 // pred_region
    _
  $region21: #{featured_transfer_forward.7} parent=0 // pred_fallthru
    _
  // Predicated region
  $region22: #{featured_transfer_forward.7} parent=0 // pred_check
    _
  $region23: #{featured_transfer_forward.7} parent=0 // pred_check_branch
    %25 = sbr.rel (0) target = $region25
  $region24: #{featured_transfer_forward.7} parent=0 // pred_region
    _
  $region25: #{featured_transfer_forward.7} parent=0 // pred_fallthru
    _
  // Predicated region
  $region26: #{featured_transfer_forward.7} parent=0 // pred_check
    _
  $region27: #{featured_transfer_forward.7} parent=0 // pred_check_branch
    %27 = sbr.rel (0) target = $region29
  $region28: #{featured_transfer_forward.7} parent=0 // pred_region
    _
  $region29: #{featured_transfer_forward.7} parent=0 // pred_fallthru
    _
  // Predicated region
  $region30: #{featured_transfer_forward.7} parent=0 // pred_check
    _
  $region31: #{featured_transfer_forward.7} parent=0 // pred_check_branch
    %29 = sbr.rel (0) target = $region33
  $region32: #{featured_transfer_forward.7} parent=0 // pred_region
    _
  $region33: #{featured_transfer_forward.7} parent=0 // pred_fallthru
    _
  // Predicated region
  $region34: #{featured_transfer_forward.7} parent=0 // pred_check
    _
  $region35: #{featured_transfer_forward.7} parent=0 // pred_check_branch
    %31 = sbr.rel (0) target = $region37
  $region36: #{featured_transfer_forward.7} parent=0 // pred_region
    _
  $region37: #{featured_transfer_forward.7} parent=0 // pred_fallthru
    _
  %p33 = scmp.eq.s32.totalorder 0, 0
  // Predicated region
  $region38: #{featured_transfer_forward.7} parent=0 // pred_check
    %p34 = pneg %p33
  $region39: #{featured_transfer_forward.7} parent=0 // pred_check_branch
    %36 = sbr.rel (%p34) target = $region41
  $region40: #{featured_transfer_forward.7} parent=0 // pred_region
    %v37 = vld [vmem:[%s0] sm:$0xff]
    %v38 = vld [vmem:[%s0 + $0x8] sm:$0xff]
    %vm39 = vcmask 261120
    %40 = vst.msk [vmem:[#allocation2] sm:$0xff] %vm39, %v37
    %41 = vst.msk [vmem:[#allocation2 + $0x8] sm:$0xff] %vm39, %v38
    %v42 = vld [vmem:[%s0] sm:$0xff]
    %v43 = vld [vmem:[%s0 + $0x8] sm:$0xff]
    %v44 = vpack.c.bf16 %v43, %v42
    %45 = vst.msk [vmem:[#allocation3] sm:$0xff] %vm39, %v44
  $region41: #{featured_transfer_forward.7} parent=0 // pred_fallthru
    _
  %v46 = vld [vmem:[%s1] sm:$0xff]
  %v47 = vld [vmem:[%s1 + $0x8] sm:$0xff]
  %v48 = vld [vmem:[%s1 + $0x10] sm:$0xff]
  %v49 = vlaneseq
  %v50 = vand.u32 %v49, 127
  %51 = vset.pattern.permute.xlu0 0
  %52 = vperm.xlu0 %51, %v46
  %v53 = vpop.permute.xlu0 %52
  %54 = vset.pattern.permute.xlu0 0
  %55 = vperm.xlu0 %54, %v47
  %v56 = vpop.permute.xlu0 %55
  %57 = vset.pattern.permute.xlu0 0
  %58 = vperm.xlu0 %57, %v48
  %v59 = vpop.permute.xlu0 %58
  %vm60 = vcmp.eq.s32.totalorder %v50, %v53
  %vm61 = vcmp.eq.s32.totalorder %v50, %v56
  %vm62 = vcmp.eq.s32.totalorder %v50, %v59
  %v63 = vsel %vm60, 1, 0
  %v64 = vsel %vm61, 1, 0
  %v65 = vsel %vm62, 1, 0
  %v66 = vcvt.s32.f32 %v63
  %v67 = vcvt.s32.f32 %v64
  %v68 = vcvt.s32.f32 %v65
  %v69 = vpack.c.bf16 %v67, %v66
  %v70 = vpack.c.bf16 %v68, %v68
  %v71 = vld [vmem:[#allocation3] sm:$0xff]
  %v72 = vld [vmem:[%s3] sm:$0xff]
  %v73 = vld [vmem:[%s3 + $0x8] sm:$0xff]
  %v74 = vld [vmem:[%s3 + $0x10] sm:$0xff]
  %vm75 = vcmask 130048
  %v77 = vsel %vm75, %v69, 0
  %v80 = vsel %vm75, %v70, 0
  %82 = vmatprep.subr.bf16.mxu0 0
  %83 = vmatpush1.bf16.msra.mxu0 %v71
  %84 = vmatprep.subr.bf16.mxu0 0
  %85 = vmatpush1.bf16.msra.mxu0 0
  %86 = vmatprep.subr.bf16.mxu0 0
  %87 = vmatpush1.bf16.msra.mxu0 0
  %88 = vmatprep.subr.bf16.mxu0 0
  %89 = vmatpush1.bf16.msra.mxu0 0
  %90 = vmatprep.subr.bf16.mxu0 0
  %91 = vmatpush1.bf16.msra.mxu0 0
  %92 = vmatprep.subr.bf16.mxu0 0
  %93 = vmatpush1.bf16.msra.mxu0 0
  %94 = vmatprep.subr.bf16.mxu0 0
  %95 = vmatpush1.bf16.msra.mxu0 0
  %96 = vmatprep.subr.bf16.mxu0 0
  %97 = vmatpush1.bf16.msra.mxu0 0
  %98 = vmatprep.subr.bf16.mxu0 0
  %99 = vmatpush1.bf16.msra.mxu0 0
  %100 = vmatprep.subr.bf16.mxu0 0
  %101 = vmatpush1.bf16.msra.mxu0 0
  %102 = vmatprep.subr.bf16.mxu0 0
  %103 = vmatpush1.bf16.msra.mxu0 0
  %104 = vmatprep.subr.bf16.mxu0 0
  %105 = vmatpush1.bf16.msra.mxu0 0
  %106 = vmatprep.subr.bf16.mxu0 0
  %107 = vmatpush1.bf16.msra.mxu0 0
  %108 = vmatprep.subr.bf16.mxu0 0
  %109 = vmatpush1.bf16.msra.mxu0 0
  %110 = vmatprep.subr.bf16.mxu0 0
  %111 = vmatpush1.bf16.msra.mxu0 0
  %112 = vmatprep.subr.bf16.mxu0 0
  %113 = vmatpush1.bf16.msra.mxu0 0
  %114 = vmatprep.mubr.bf16.mxu0 0
  %115 = vmatmul.mubr.bf16.gmra.mrb[0].mxu0 %v77
  %v116 = vpop.f32.mrb[0].mxu0
  %v117 = vadd.f32 %v72, %v116
  %v118 = vpop.f32.mrb[0].mxu0
  %v119 = vpop.f32.mrb[0].mxu0
  %v120 = vadd.f32 %v73, %v119
  %v121 = vpop.f32.mrb[0].mxu0
  %122 = vmatprep.mubr.bf16.mxu0 0
  %123 = vmatmul.mubr.bf16.gmra.mrb[0].mxu0 %v80
  %v124 = vpop.f32.mrb[0].mxu0
  %v125 = vadd.f32 %v74, %v124
  %v126 = vpop.f32.mrb[0].mxu0
  %v127 = vpop.f32.mrb[0].mxu0
  %v128 = vpop.f32.mrb[0].mxu0
  %129 = vdwg.mxu0
  %v130 = vmax.f32 %v117, 0.0
  %v131 = vmax.f32 %v120, 0.0
  %v132 = vmax.f32 %v125, 0.0
  %v133 = vld [vmem:[%s4] sm:$0xff]
  %v134 = vld [vmem:[%s4 + $0x8] sm:$0xff]
  %v135 = vld [vmem:[%s4 + $0x10] sm:$0xff]
  %137 = vset.pattern.permute.xlu0 0
  %138 = vperm.xlu0 %137, %v133
  %v139 = vpop.permute.xlu0 %138
  %142 = vset.pattern.permute.xlu0 0
  %143 = vperm.xlu0 %142, %v134
  %v144 = vpop.permute.xlu0 %143
  %147 = vset.pattern.permute.xlu0 0
  %148 = vperm.xlu0 %147, %v135
  %v149 = vpop.permute.xlu0 %148
  %v151 = vmul.f32 %v130, %v139
  %v152 = vmul.f32 %v131, %v144
  %v153 = vmul.f32 %v132, %v149
  %v154 = vld [vmem:[%s2] sm:$0x1]
  %v155 = vlaneseq
  %v156 = vshrl.u32 %v155, 7
  %v157 = vadd.s32 %v156, 8
  %v158 = vlaneseq
  %v159 = vshrl.u32 %v158, 7
  %v160 = vsub.s32 0, %v159
  %v161 = vrot.slane %v154, %v160
  %vm162 = vcmp.eq.s32.totalorder %v156, %v161
  %vm163 = vcmp.eq.s32.totalorder %v157, %v161
  %v164 = vsel %vm162, 1, 0
  %v165 = vsel %vm163, 1, 0
  %v166 = vcvt.s32.f32 %v164
  %v167 = vcvt.s32.f32 %v165
  %v168 = vpack.c.bf16 %v167, %v166
  %v169 = vld [vmem:[#allocation2] sm:$0xff]
  %v170 = vld [vmem:[#allocation2 + $0x8] sm:$0xff]
  %v171 = vpack.c.bf16 %v152, %v151
  %v172 = vpack.c.bf16 %v153, %v153
  %vm173 = vcmask 195584
  %v175 = vsel %vm173, %v168, 0
  %vm177 = vcmask 1043456
  %v179 = vsel %vm177, %v172, 0
  %181 = vmatprep.subr.bf16.mxu0 0
  %182 = vmatpush1.bf16.msra.mxu0 %v171
  %183 = vmatprep.subr.bf16.mxu0 0
  %184 = vmatpush1.bf16.msra.mxu0 %v179
  %185 = vmatprep.subr.bf16.mxu0 0
  %186 = vmatpush1.bf16.msra.mxu0 0
  %187 = vmatprep.subr.bf16.mxu0 0
  %188 = vmatpush1.bf16.msra.mxu0 0
  %189 = vmatprep.subr.bf16.mxu0 0
  %190 = vmatpush1.bf16.msra.mxu0 0
  %191 = vmatprep.subr.bf16.mxu0 0
  %192 = vmatpush1.bf16.msra.mxu0 0
  %193 = vmatprep.subr.bf16.mxu0 0
  %194 = vmatpush1.bf16.msra.mxu0 0
  %195 = vmatprep.subr.bf16.mxu0 0
  %196 = vmatpush1.bf16.msra.mxu0 0
  %197 = vmatprep.subr.bf16.mxu0 0
  %198 = vmatpush1.bf16.msra.mxu0 0
  %199 = vmatprep.subr.bf16.mxu0 0
  %200 = vmatpush1.bf16.msra.mxu0 0
  %201 = vmatprep.subr.bf16.mxu0 0
  %202 = vmatpush1.bf16.msra.mxu0 0
  %203 = vmatprep.subr.bf16.mxu0 0
  %204 = vmatpush1.bf16.msra.mxu0 0
  %205 = vmatprep.subr.bf16.mxu0 0
  %206 = vmatpush1.bf16.msra.mxu0 0
  %207 = vmatprep.subr.bf16.mxu0 0
  %208 = vmatpush1.bf16.msra.mxu0 0
  %209 = vmatprep.subr.bf16.mxu0 0
  %210 = vmatpush1.bf16.msra.mxu0 0
  %211 = vmatprep.subr.bf16.mxu0 0
  %212 = vmatpush1.bf16.msra.mxu0 0
  %213 = vmatprep.mubr.bf16.mxu0 0
  %214 = vmatmul.mubr.bf16.gmra.mrb[0].mxu0 %v175
  %v215 = vpop.f32.mrb[0].mxu0
  %v216 = vadd.f32 0.0, %v215
  %v217 = vpop.f32.mrb[0].mxu0
  %v218 = vpop.f32.mrb[0].mxu0
  %v219 = vadd.f32 0.0, %v218
  %v220 = vpop.f32.mrb[0].mxu0
  %221 = vdwg.mxu0
  %v222 = vadd.f32 %v169, %v216
  %v223 = vadd.f32 %v170, %v219
  %vm224 = vcmask 261120
  %225 = vst.msk [vmem:[#allocation2] sm:$0xff] %vm224, %v222
  %226 = vst.msk [vmem:[#allocation2 + $0x8] sm:$0xff] %vm224, %v223
  // Predicated region
  $region42: #{featured_transfer_forward.7} parent=0 // pred_check
    %p227 = pneg %p33
  $region43: #{featured_transfer_forward.7} parent=0 // pred_check_branch
    %229 = sbr.rel (%p227) target = $region45
  $region44: #{featured_transfer_forward.7} parent=0 // pred_region
    %v230 = vld [vmem:[#allocation2] sm:$0xff]
    %v231 = vld [vmem:[#allocation2 + $0x8] sm:$0xff]
    %v232 = vpack.c.bf16 %v231, %v230
    %v233 = vld [vmem:[%s5] sm:$0xf]
    %v234 = vld [vmem:[%s5 + $0x4] sm:$0xf]
    %v235 = vld [vmem:[%s5 + $0x8] sm:$0xf]
    %v236 = vld [vmem:[%s5 + $0xc] sm:$0xf]
    %v237 = vld [vmem:[%s6] sm:$0x1]
    %v239 = vlaneseq
    %v240 = vshrl.u32 %v239, 7
    %v241 = vsub.s32 0, %v240
    %v242 = vrot.slane %v237, %v241
    %v248 = vunpack.c.l.b16 %v233
    %v249 = vunpack.c.l.b16 %v234
    %v250 = vunpack.c.l.b16 %v235
    %v251 = vunpack.c.l.b16 %v236
    %v252 = vpack.c.b16 %v249, %v248
    %v253 = vpack.c.b16 %v251, %v250
    %v257 = vsel %vm224, %v232, 0
    %259 = vmatprep.subr.bf16.mxu0 0
    %260 = vmatpush1.bf16.msra.mxu0 %v252
    %261 = vmatprep.subr.bf16.mxu0 0
    %262 = vmatpush1.bf16.msra.mxu0 %v253
    %263 = vmatprep.subr.bf16.mxu0 0
    %264 = vmatpush1.bf16.msra.mxu0 0
    %265 = vmatprep.subr.bf16.mxu0 0
    %266 = vmatpush1.bf16.msra.mxu0 0
    %267 = vmatprep.subr.bf16.mxu0 0
    %268 = vmatpush1.bf16.msra.mxu0 0
    %269 = vmatprep.subr.bf16.mxu0 0
    %270 = vmatpush1.bf16.msra.mxu0 0
    %271 = vmatprep.subr.bf16.mxu0 0
    %272 = vmatpush1.bf16.msra.mxu0 0
    %273 = vmatprep.subr.bf16.mxu0 0
    %274 = vmatpush1.bf16.msra.mxu0 0
    %275 = vmatprep.subr.bf16.mxu0 0
    %276 = vmatpush1.bf16.msra.mxu0 0
    %277 = vmatprep.subr.bf16.mxu0 0
    %278 = vmatpush1.bf16.msra.mxu0 0
    %279 = vmatprep.subr.bf16.mxu0 0
    %280 = vmatpush1.bf16.msra.mxu0 0
    %281 = vmatprep.subr.bf16.mxu0 0
    %282 = vmatpush1.bf16.msra.mxu0 0
    %283 = vmatprep.subr.bf16.mxu0 0
    %284 = vmatpush1.bf16.msra.mxu0 0
    %285 = vmatprep.subr.bf16.mxu0 0
    %286 = vmatpush1.bf16.msra.mxu0 0
    %287 = vmatprep.subr.bf16.mxu0 0
    %288 = vmatpush1.bf16.msra.mxu0 0
    %289 = vmatprep.subr.bf16.mxu0 0
    %290 = vmatpush1.bf16.msra.mxu0 0
    %291 = vmatprep.mubr.bf16.mxu0 0
    %292 = vmatmul.mubr.bf16.gmra.mrb[0].mxu0 %v257
    %v293 = vpop.f32.mrb[0].mxu0
    %v294 = vadd.f32 %v242, %v293
    %v295 = vpop.f32.mrb[0].mxu0
    %v296 = vpop.f32.mrb[0].mxu0
    %v297 = vadd.f32 %v242, %v296
    %v298 = vpop.f32.mrb[0].mxu0
    %299 = vdwg.mxu0
    %v300 = vmax.f32 %v294, 0.0
    %v301 = vmax.f32 %v297, 0.0
    %v302 = vpack.c.bf16 %v301, %v300
    %v303 = vld [vmem:[%s7] sm:$0xf]
    %v304 = vld [vmem:[%s7 + $0x4] sm:$0xf]
    %v305 = vld [vmem:[%s7 + $0x8] sm:$0xf]
    %v306 = vld [vmem:[%s7 + $0xc] sm:$0xf]
    %v307 = vld [vmem:[%s7 + $0x10] sm:$0xf]
    %v308 = vld [vmem:[%s7 + $0x14] sm:$0xf]
    %v309 = vld [vmem:[%s7 + $0x18] sm:$0xf]
    %v310 = vld [vmem:[%s7 + $0x1c] sm:$0xf]
    %v311 = vld [vmem:[%s8] sm:$0x1]
    %v313 = vlaneseq
    %v314 = vshrl.u32 %v313, 7
    %v315 = vsub.s32 0, %v314
    %v316 = vrot.slane %v311, %v315
    %v326 = vunpack.c.l.b16 %v303
    %v327 = vunpack.c.l.b16 %v304
    %v328 = vunpack.c.l.b16 %v305
    %v329 = vunpack.c.l.b16 %v306
    %v330 = vunpack.c.l.b16 %v307
    %v331 = vunpack.c.l.b16 %v308
    %v332 = vunpack.c.l.b16 %v309
    %v333 = vunpack.c.l.b16 %v310
    %v334 = vpack.c.b16 %v327, %v326
    %v335 = vpack.c.b16 %v329, %v328
    %v336 = vpack.c.b16 %v331, %v330
    %v337 = vpack.c.b16 %v333, %v332
    %vm342 = vcmask 523264
    %v344 = vsel %vm342, %v302, 0
    %346 = vmatprep.subr.bf16.mxu0 0
    %347 = vmatpush1.bf16.msra.mxu0 %v334
    %348 = vmatprep.subr.bf16.mxu0 0
    %349 = vmatpush1.bf16.msra.mxu0 %v335
    %350 = vmatprep.subr.bf16.mxu0 0
    %351 = vmatpush1.bf16.msra.mxu0 %v336
    %352 = vmatprep.subr.bf16.mxu0 0
    %353 = vmatpush1.bf16.msra.mxu0 %v337
    %354 = vmatprep.subr.bf16.mxu0 0
    %355 = vmatpush1.bf16.msra.mxu0 0
    %356 = vmatprep.subr.bf16.mxu0 0
    %357 = vmatpush1.bf16.msra.mxu0 0
    %358 = vmatprep.subr.bf16.mxu0 0
    %359 = vmatpush1.bf16.msra.mxu0 0
    %360 = vmatprep.subr.bf16.mxu0 0
    %361 = vmatpush1.bf16.msra.mxu0 0
    %362 = vmatprep.subr.bf16.mxu0 0
    %363 = vmatpush1.bf16.msra.mxu0 0
    %364 = vmatprep.subr.bf16.mxu0 0
    %365 = vmatpush1.bf16.msra.mxu0 0
    %366 = vmatprep.subr.bf16.mxu0 0
    %367 = vmatpush1.bf16.msra.mxu0 0
    %368 = vmatprep.subr.bf16.mxu0 0
    %369 = vmatpush1.bf16.msra.mxu0 0
    %370 = vmatprep.subr.bf16.mxu0 0
    %371 = vmatpush1.bf16.msra.mxu0 0
    %372 = vmatprep.subr.bf16.mxu0 0
    %373 = vmatpush1.bf16.msra.mxu0 0
    %374 = vmatprep.subr.bf16.mxu0 0
    %375 = vmatpush1.bf16.msra.mxu0 0
    %376 = vmatprep.subr.bf16.mxu0 0
    %377 = vmatpush1.bf16.msra.mxu0 0
    %378 = vmatprep.mubr.bf16.mxu0 0
    %379 = vmatmul.mubr.bf16.gmra.mrb[0].mxu0 %v344
    %v380 = vpop.f32.mrb[0].mxu0
    %v381 = vadd.f32 %v316, %v380
    %v382 = vpop.f32.mrb[0].mxu0
    %v383 = vpop.f32.mrb[0].mxu0
    %v384 = vadd.f32 %v316, %v383
    %v385 = vpop.f32.mrb[0].mxu0
    %386 = vdwg.mxu0
    %v387 = vmax.f32 %v381, 0.0
    %v388 = vmax.f32 %v384, 0.0
    %389 = vst.msk [vmem:[%s9] sm:$0xff] %vm224, %v387
    %390 = vst.msk [vmem:[%s9 + $0x8] sm:$0xff] %vm224, %v388
  $region45: #{featured_transfer_forward.7} parent=0 // pred_fallthru
    _
  // Predicated region
  $region46: #{featured_transfer_forward.7} parent=0 // pred_check
    _
  $region47: #{featured_transfer_forward.7} parent=0 // pred_check_branch
    %392 = sbr.rel (0) target = $region49
  $region48: #{featured_transfer_forward.7} parent=0 // pred_region
    _
  $region49: #{featured_transfer_forward.7} parent=0 // pred_fallthru
    _
  // Predicated region
  $region50: #{featured_transfer_forward.7} parent=0 // pred_check
    _
  $region51: #{featured_transfer_forward.7} parent=0 // pred_check_branch
    %394 = sbr.rel (0) target = $region53
  $region52: #{featured_transfer_forward.7} parent=0 // pred_region
    _
  $region53: #{featured_transfer_forward.7} parent=0 // pred_fallthru
    _

</llo_original>
